<compile_context>
chip_gen: v5e
topology: v5e:2x2
jax: 0.10.0
libtpu: 0.0.40
codegen_flags: <defaults>
</compile_context>

<pallas_src>
import math

import jax
import jax.numpy as jnp
from jax.experimental import pallas as pl
from jax.experimental.pallas import tpu as pltpu

EPS = 1e-5


# ---------------------------------------------------------------------------
# Pallas kernels
# ---------------------------------------------------------------------------
def conv_bn_htanh_pool_kernel(p_ref, w_ref, g_ref, b_ref, o_ref):
    """conv (im2col matmul, bf16 in / f32 acc) + BatchNorm2d (batch stats folded
    into one scale/shift) + Hardtanh + AvgPool2d(2, 2).

    Patch rows are pre-grouped by pooling tap: rows [g*Q, (g+1)*Q) hold tap
    g = (di, dj) for all Q pooled output pixels, so the 2x2 average pool is the
    mean of four contiguous row blocks (pure VPU, no pooling matrix).
    """
    y = jnp.dot(p_ref[...], w_ref[...], preferred_element_type=jnp.float32)
    r = y.shape[0]
    q = r // 4
    inv_r = 1.0 / r
    mean = jnp.sum(y, axis=0, keepdims=True) * inv_r
    var = jnp.sum(y * y, axis=0, keepdims=True) * inv_r - mean * mean    # biased
    scale = g_ref[...] * jax.lax.rsqrt(var + EPS)
    shift = b_ref[...] - mean * scale
    y = jnp.clip(y * scale + shift, -1.0, 1.0)                           # Hardtanh
    pooled = 0.25 * (y[0:q] + y[q:2 * q] + y[2 * q:3 * q] + y[3 * q:4 * q])
    o_ref[...] = pooled.astype(o_ref.dtype)


def conv2_head_kernel(p_ref, w2_ref, g2_ref, b2_ref,
                      w3_ref, g3_ref, b3_ref,
                      w4_ref, g4_ref, b4_ref,
                      out_ref, h2_ref):
    """Fused conv2 + bn2 + hardtanh + avgpool(2,2) + fc3 + bn3 + hardtanh
    + fc4 + bn4 + log_softmax.  Pooled activations live in VMEM scratch."""
    nb = out_ref.shape[0]                     # batch size B

    # ---- conv2 (im2col matmul) + bn2 + hardtanh + pool2 --------------------
    y = jnp.dot(p_ref[...], w2_ref[...], preferred_element_type=jnp.float32)
    r = y.shape[0]
    q = r // 4                                # q = B*4*4 rows, ordered (spatial, b)
    inv_r = 1.0 / r
    mean = jnp.sum(y, axis=0, keepdims=True) * inv_r
    var = jnp.sum(y * y, axis=0, keepdims=True) * inv_r - mean * mean
    scale = g2_ref[...] * jax.lax.rsqrt(var + EPS)
    shift = b2_ref[...] - mean * scale
    y = jnp.clip(y * scale + shift, -1.0, 1.0)
    h2_ref[...] = (0.25 * (y[0:q] + y[q:2 * q] + y[2 * q:3 * q] + y[3 * q:4 * q])
                   ).astype(h2_ref.dtype)

    # ---- fc3 (NCHW flatten permutation baked into w3) ----------------------
    n_spatial = w3_ref.shape[0]               # 16 pooled spatial positions
    h3 = jnp.zeros((nb, w3_ref.shape[2]), jnp.float32)
    for s in range(n_spatial):                # static loop: 16 small MXU matmuls
        xs = h2_ref[pl.ds(s * nb, nb), :]     # (B, 25) bf16, all batches at pos s
        h3 = h3 + jnp.dot(xs, w3_ref[s], preferred_element_type=jnp.float32)
    # fc3 bias omitted: exactly cancelled by bn3's batch-mean subtraction.

    # ---- bn3 + hardtanh -----------------------------------------------------
    m = jnp.mean(h3, axis=0, keepdims=True)
    v = jnp.mean(h3 * h3, axis=0, keepdims=True) - m * m
    sc3 = g3_ref[...] * jax.lax.rsqrt(v + EPS)
    h3 = jnp.clip(h3 * sc3 + (b3_ref[...] - m * sc3), -1.0, 1.0)

    # ---- fc4 + bn4 + log_softmax -------------------------------------------
    z = jnp.dot(h3.astype(w4_ref.dtype), w4_ref[...],
                preferred_element_type=jnp.float32)
    # fc4 bias omitted: cancelled by bn4's batch-mean subtraction.
    m = jnp.mean(z, axis=0, keepdims=True)
    v = jnp.mean(z * z, axis=0, keepdims=True) - m * m
    sc4 = g4_ref[...] * jax.lax.rsqrt(v + EPS)
    z = z * sc4 + (b4_ref[...] - m * sc4)
    zmax = jnp.max(z, axis=1, keepdims=True)
    lse = jnp.log(jnp.sum(jnp.exp(z - zmax), axis=1, keepdims=True)) + zmax
    out_ref[...] = z - lse                    # log_softmax(dim=1)


# ---------------------------------------------------------------------------
# pallas_call wrappers
# ---------------------------------------------------------------------------
def _vmem_spec():
    return pl.BlockSpec(memory_space=pltpu.MemorySpace.VMEM)


def _padded_bytes(shape, dtype):
    """(8,128)-padded VMEM bytes for a row-major array."""
    if len(shape) == 0:
        rows, cols = 1, 1
    elif len(shape) == 1:
        rows, cols = 1, shape[0]
    else:
        rows, cols = math.prod(shape[:-1]), shape[-1]
    rows_p = -(-rows // 8) * 8
    cols_p = -(-cols // 128) * 128
    return rows_p * cols_p * jnp.dtype(dtype).itemsize


def _vmem_limit(*arrays):
    total = sum(_padded_bytes(a.shape, a.dtype) for a in arrays)
    # 2x for double-buffering headroom + 1 MiB slack; clamp to a v7x-safe range.
    return int(min(max(4 * 1024 * 1024, 2 * total + 1024 * 1024),
                   48 * 1024 * 1024))


def conv_stage(patches, w, gamma, beta, out_dtype=jnp.float32):
    rows_out, cout = patches.shape[0] // 4, w.shape[1]
    flops = 2 * patches.shape[0] * patches.shape[1] * cout + 10 * patches.shape[0] * cout
    bytes_accessed = (int(patches.size) * patches.dtype.itemsize
                      + int(w.size) * w.dtype.itemsize
                      + rows_out * cout * jnp.dtype(out_dtype).itemsize)
    return pl.pallas_call(
        conv_bn_htanh_pool_kernel,
        out_shape=jax.ShapeDtypeStruct((rows_out, cout), out_dtype),
        in_specs=[_vmem_spec()] * 4,
        out_specs=_vmem_spec(),
        compiler_params=pltpu.CompilerParams(
            vmem_limit_bytes=_vmem_limit(patches, w)),
        cost_estimate=pl.CostEstimate(flops=int(flops),
                                      transcendentals=int(cout),
                                      bytes_accessed=int(bytes_accessed)),
    )(patches, w, gamma, beta)


def conv2_head_stage(p2, w2, g2, b2, w3, g3, b3, w4, g4, b4, batch):
    nclass = w4.shape[1]
    flops = (2 * p2.shape[0] * p2.shape[1] * w2.shape[1]
             + 2 * batch * w3.shape[0] * w3.shape[1] * w3.shape[2]
             + 2 * batch * w4.shape[0] * nclass)
    bytes_accessed = sum(int(a.size) * a.dtype.itemsize for a in (p2, w2, w3, w4)) \
        + batch * nclass * 4
    return pl.pallas_call(
        conv2_head_kernel,
        out_shape=jax.ShapeDtypeStruct((batch, nclass), jnp.float32),
        in_specs=[_vmem_spec()] * 10,
        out_specs=_vmem_spec(),
        scratch_shapes=[pltpu.VMEM((batch * w3.shape[0], w2.shape[1]), jnp.bfloat16)],
        compiler_params=pltpu.CompilerParams(
            vmem_limit_bytes=_vmem_limit(p2, w2, w3, w4)),
        cost_estimate=pl.CostEstimate(flops=int(flops),
                                      transcendentals=int(batch * nclass + 256),
                                      bytes_accessed=int(bytes_accessed)),
    )(p2, w2, g2, b2, w3, g3, b3, w4, g4, b4)


# ---------------------------------------------------------------------------
# JAX glue: im2col, pool-tap row grouping, weight repacking (all tiny, O(B))
# ---------------------------------------------------------------------------
def im2col_nhwc(x, kh, kw):
    """Valid (kh, kw) patches: (B, Ho, Wo, kh*kw*C), feature order (ki, kj, c)."""
    B, H, W, C = x.shape
    Ho, Wo = H - kh + 1, W - kw + 1
    taps = []
    for i in range(kh):
        for j in range(kw):
            taps.append(x[:, i:i + Ho, j:j + Wo, :])
    return jnp.stack(taps, axis=3).reshape(B, Ho, Wo, kh * kw * C)


def pool_grouped_rows(p, order):
    """Regroup conv-patch rows by 2x2 pooling tap.

    p: (B, Hc, Wc, K) with Hc, Wc even.  Returns (4*Q, K), Q = B*(Hc//2)*(Wc//2);
    rows [g*Q, (g+1)*Q) hold pooling tap g = (di, dj).  Within-tap row order:
    'bs' -> (b, io, jo)   (used for stage 1: natural NHWC order)
    'sb' -> (io, jo, b)   (used for stage 2: lets the fused head read per-spatial
                           (B, C) slabs as contiguous slices)
    """
    K = p.shape[-1]
    taps = []
    for di in range(2):
        for dj in range(2):
            t = p[:, di::2, dj::2, :]
            if order == "sb":
                t = jnp.transpose(t, (1, 2, 0, 3))
            taps.append(t.reshape(-1, K))
    return jnp.concatenate(taps, axis=0)


def conv_weight_to_matrix(w_oihw, dtype=jnp.bfloat16):
    """(Cout, Cin, kh, kw) -> (kh*kw*Cin, Cout), matching im2col feature order."""
    return jnp.transpose(w_oihw, (2, 3, 1, 0)).reshape(-1, w_oihw.shape[0]).astype(dtype)


# ---------------------------------------------------------------------------
# Full forward pass (PyTorch NCHW input)
# ---------------------------------------------------------------------------
def net_forward(x_nchw, params):
    B = x_nchw.shape[0]
    x = jnp.transpose(x_nchw, (0, 2, 3, 1))                     # NCHW -> NHWC

    # stage 1: conv1 (1->3, 3x3, valid) + bn1 + hardtanh + avgpool(2,2)
    p1 = pool_grouped_rows(im2col_nhwc(x, 3, 3), order="bs")    # (4*B*64, 9)
    h1 = conv_stage(p1.astype(jnp.bfloat16),
                    params["w1"], params["g1"], params["b1"])   # (B*64, 3), rows (b,io,jo)

    # stage 2 + head, fused into one kernel.
    h1 = h1.reshape(B, 8, 8, 3)
    h1 = jnp.pad(h1, ((0, 0), (1, 1), (1, 1), (0, 0)))          # conv2 padding=1
    p2 = pool_grouped_rows(im2col_nhwc(h1, 3, 3), order="sb")   # (4*B*16, 27)
    return conv2_head_stage(p2.astype(jnp.bfloat16),
                            params["w2"], params["g2"], params["b2"],
                            params["w3"], params["g3"], params["be3"],
                            params["w4"], params["g4"], params["be4"], B)


def init_params(key):
    k1, k2, k3, k4 = jax.random.split(key, 4)
    w1 = jax.random.normal(k1, (3, 1, 3, 3), jnp.float32) * 0.3    # Conv2d(1, 3, 3), bias=None
    w2 = jax.random.normal(k2, (25, 3, 3, 3), jnp.float32) * 0.2   # Conv2d(3, 25, 3, pad=1), bias=None
    w3 = jax.random.normal(k3, (150, 400), jnp.float32) * 0.05     # Linear(400, 150)
    w4 = jax.random.normal(k4, (10, 150), jnp.float32) * 0.1       # Linear(150, 10)
    # fc3/fc4 biases intentionally omitted: a constant added before a
    # training-mode BatchNorm is exactly cancelled by the batch-mean subtraction.
    # Bake the PyTorch x.view(-1, 25*4*4) flatten order (feature f = c*16 + s,
    # s = i*4 + j) into w3 once: store it as (16 spatial, 25 ch, 150 out).
    w3_t = jnp.transpose(w3)                                       # (400, 150), row f = c*16 + s
    w3_p = jnp.transpose(w3_t.reshape(25, 16, 150), (1, 0, 2))     # (16, 25, 150) = [s, c, :]
    return dict(
        w1=conv_weight_to_matrix(w1),                              # (9, 3)  bf16
        w2=conv_weight_to_matrix(w2),                              # (27, 25) bf16
        g1=jnp.ones((1, 3), jnp.float32), b1=jnp.zeros((1, 3), jnp.float32),
        g2=jnp.ones((1, 25), jnp.float32), b2=jnp.zeros((1, 25), jnp.float32),
        w3=w3_p.astype(jnp.bfloat16),                              # (16, 25, 150) bf16
        g3=jnp.ones((1, 150), jnp.float32), be3=jnp.zeros((1, 150), jnp.float32),
        w4=jnp.transpose(w4).astype(jnp.bfloat16),                 # (150, 10) bf16
        g4=jnp.ones((1, 10), jnp.float32), be4=jnp.zeros((1, 10), jnp.float32),
    )


if __name__ == "__main__":
    key = jax.random.PRNGKey(0)
    kx, kp = jax.random.split(key)
    # fc3 expects 25*4*4 features => spatial input must be 18x18 with 1 channel.
    x = jax.random.normal(kx, (2, 1, 18, 18), jnp.float32)
    params = init_params(kp)

    out = jax.jit(net_forward)(x, params)
    out = jax.block_until_ready(out)

    assert out.shape == (2, 10) and out.dtype == jnp.float32
    assert bool(jnp.all(jnp.isfinite(out)))
    # log_softmax rows must exponentiate-sum to ~1
    assert bool(jnp.allclose(jnp.sum(jnp.exp(out), axis=1), 1.0, atol=1e-4))
    print("KERNEL_OK")
</pallas_src>

<mosaic_0001>
module attributes {stable_mosaic.version = 11 : i64} {
  func.func @conv_bn_htanh_pool_kernel(%arg0: memref<512x9xbf16, #tpu.memory_space<vmem>>, %arg1: memref<9x3xbf16, #tpu.memory_space<vmem>>, %arg2: memref<1x3xf32, #tpu.memory_space<vmem>>, %arg3: memref<1x3xf32, #tpu.memory_space<vmem>>, %arg4: memref<128x3xf32, #tpu.memory_space<vmem>>) attributes {dimension_semantics = [], scalar_prefetch = 0 : i64, scratch_operands = 0 : i64, tpu.core_type = #tpu.core_type<tc>} {
    %c0 = arith.constant 0 : index
    %c0_0 = arith.constant 0 : index
    %0 = vector.load %arg0[%c0, %c0_0] : memref<512x9xbf16, #tpu.memory_space<vmem>>, vector<512x9xbf16>
    %c0_1 = arith.constant 0 : index
    %c0_2 = arith.constant 0 : index
    %1 = vector.load %arg1[%c0_1, %c0_2] : memref<9x3xbf16, #tpu.memory_space<vmem>>, vector<9x3xbf16>
    %cst = arith.constant dense<0.000000e+00> : vector<512x3xf32>
    %2 = tpu.matmul %0, %1, %cst {dimension_numbers = #tpu.dot_dimension_numbers<[1], [0], [0], [1], [0, 0, 1, 1], [], []>} : vector<512x9xbf16>, vector<9x3xbf16>, vector<512x3xf32> -> vector<512x3xf32>
    %cst_3 = arith.constant dense<0.000000e+00> : vector<3xf32>
    %3 = vector.multi_reduction <add>, %2, %cst_3 [0] : vector<512x3xf32> to vector<3xf32>
    %4 = vector.shape_cast %3 : vector<3xf32> to vector<1x3xf32>
    %cst_4 = arith.constant 0.001953125 : f32
    %5 = vector.broadcast %cst_4 : f32 to vector<1x3xf32>
    %6 = arith.mulf %4, %5 : vector<1x3xf32>
    %7 = arith.mulf %2, %2 : vector<512x3xf32>
    %cst_5 = arith.constant dense<0.000000e+00> : vector<3xf32>
    %8 = vector.multi_reduction <add>, %7, %cst_5 [0] : vector<512x3xf32> to vector<3xf32>
    %9 = vector.shape_cast %8 : vector<3xf32> to vector<1x3xf32>
    %cst_6 = arith.constant 0.001953125 : f32
    %10 = vector.broadcast %cst_6 : f32 to vector<1x3xf32>
    %11 = arith.mulf %9, %10 : vector<1x3xf32>
    %12 = arith.mulf %6, %6 : vector<1x3xf32>
    %13 = arith.subf %11, %12 : vector<1x3xf32>
    %c0_7 = arith.constant 0 : index
    %c0_8 = arith.constant 0 : index
    %14 = vector.load %arg2[%c0_7, %c0_8] : memref<1x3xf32, #tpu.memory_space<vmem>>, vector<1x3xf32>
    %cst_9 = arith.constant 9.99999974E-6 : f32
    %15 = vector.broadcast %cst_9 : f32 to vector<1x3xf32>
    %16 = arith.addf %13, %15 : vector<1x3xf32>
    %17 = math.rsqrt %16 : vector<1x3xf32>
    %18 = arith.mulf %14, %17 : vector<1x3xf32>
    %c0_10 = arith.constant 0 : index
    %c0_11 = arith.constant 0 : index
    %19 = vector.load %arg3[%c0_10, %c0_11] : memref<1x3xf32, #tpu.memory_space<vmem>>, vector<1x3xf32>
    %20 = arith.mulf %6, %18 : vector<1x3xf32>
    %21 = arith.subf %19, %20 : vector<1x3xf32>
    %22 = vector.broadcast %18 : vector<1x3xf32> to vector<512x3xf32>
    %23 = arith.mulf %2, %22 : vector<512x3xf32>
    %24 = vector.broadcast %21 : vector<1x3xf32> to vector<512x3xf32>
    %25 = arith.addf %23, %24 : vector<512x3xf32>
    %cst_12 = arith.constant -1.000000e+00 : f32
    %cst_13 = arith.constant 1.000000e+00 : f32
    %26 = vector.broadcast %cst_12 : f32 to vector<512x3xf32>
    %27 = arith.maximumf %26, %25 : vector<512x3xf32>
    %28 = vector.broadcast %cst_13 : f32 to vector<512x3xf32>
    %29 = arith.minimumf %28, %27 : vector<512x3xf32>
    %30 = vector.extract_strided_slice %29 {offsets = [0, 0], sizes = [128, 3], strides = [1, 1]} : vector<512x3xf32> to vector<128x3xf32>
    %31 = vector.extract_strided_slice %29 {offsets = [128, 0], sizes = [128, 3], strides = [1, 1]} : vector<512x3xf32> to vector<128x3xf32>
    %32 = arith.addf %30, %31 : vector<128x3xf32>
    %33 = vector.extract_strided_slice %29 {offsets = [256, 0], sizes = [128, 3], strides = [1, 1]} : vector<512x3xf32> to vector<128x3xf32>
    %34 = arith.addf %32, %33 : vector<128x3xf32>
    %35 = vector.extract_strided_slice %29 {offsets = [384, 0], sizes = [128, 3], strides = [1, 1]} : vector<512x3xf32> to vector<128x3xf32>
    %36 = arith.addf %34, %35 : vector<128x3xf32>
    %cst_14 = arith.constant 2.500000e-01 : f32
    %37 = vector.broadcast %cst_14 : f32 to vector<128x3xf32>
    %38 = arith.mulf %37, %36 : vector<128x3xf32>
    %c0_15 = arith.constant 0 : index
    %c0_16 = arith.constant 0 : index
    %39 = vector.load %arg4[%c0_15, %c0_16] : memref<128x3xf32, #tpu.memory_space<vmem>>, vector<128x3xf32>
    tpu.vector_store %arg4[%c0_15, %c0_16], %38 {strides = array<i32>} : memref<128x3xf32, #tpu.memory_space<vmem>>, vector<128x3xf32>,
    return
  }
}

module attributes {stable_mosaic.version = 11 : i64} {
  func.func @conv2_head_kernel(%arg0: memref<128x27xbf16, #tpu.memory_space<vmem>>, %arg1: memref<27x25xbf16, #tpu.memory_space<vmem>>, %arg2: memref<1x25xf32, #tpu.memory_space<vmem>>, %arg3: memref<1x25xf32, #tpu.memory_space<vmem>>, %arg4: memref<16x25x150xbf16, #tpu.memory_space<vmem>>, %arg5: memref<1x150xf32, #tpu.memory_space<vmem>>, %arg6: memref<1x150xf32, #tpu.memory_space<vmem>>, %arg7: memref<150x10xbf16, #tpu.memory_space<vmem>>, %arg8: memref<1x10xf32, #tpu.memory_space<vmem>>, %arg9: memref<1x10xf32, #tpu.memory_space<vmem>>, %arg10: memref<2x10xf32, #tpu.memory_space<vmem>>, %arg11: memref<32x25xbf16, #tpu.memory_space<vmem>>) attributes {dimension_semantics = [], scalar_prefetch = 0 : i64, scratch_operands = 1 : i64, tpu.core_type = #tpu.core_type<tc>} {
    %c0 = arith.constant 0 : index
    %c0_0 = arith.constant 0 : index
    %0 = vector.load %arg0[%c0, %c0_0] : memref<128x27xbf16, #tpu.memory_space<vmem>>, vector<128x27xbf16>
    %c0_1 = arith.constant 0 : index
    %c0_2 = arith.constant 0 : index
    %1 = vector.load %arg1[%c0_1, %c0_2] : memref<27x25xbf16, #tpu.memory_space<vmem>>, vector<27x25xbf16>
    %cst = arith.constant dense<0.000000e+00> : vector<128x25xf32>
    %2 = tpu.matmul %0, %1, %cst {dimension_numbers = #tpu.dot_dimension_numbers<[1], [0], [0], [1], [0, 0, 1, 1], [], []>} : vector<128x27xbf16>, vector<27x25xbf16>, vector<128x25xf32> -> vector<128x25xf32>
    %cst_3 = arith.constant dense<0.000000e+00> : vector<25xf32>
    %3 = vector.multi_reduction <add>, %2, %cst_3 [0] : vector<128x25xf32> to vector<25xf32>
    %4 = vector.shape_cast %3 : vector<25xf32> to vector<1x25xf32>
    %cst_4 = arith.constant 7.812500e-03 : f32
    %5 = vector.broadcast %cst_4 : f32 to vector<1x25xf32>
    %6 = arith.mulf %4, %5 : vector<1x25xf32>
    %7 = arith.mulf %2, %2 : vector<128x25xf32>
    %cst_5 = arith.constant dense<0.000000e+00> : vector<25xf32>
    %8 = vector.multi_reduction <add>, %7, %cst_5 [0] : vector<128x25xf32> to vector<25xf32>
    %9 = vector.shape_cast %8 : vector<25xf32> to vector<1x25xf32>
    %cst_6 = arith.constant 7.812500e-03 : f32
    %10 = vector.broadcast %cst_6 : f32 to vector<1x25xf32>
    %11 = arith.mulf %9, %10 : vector<1x25xf32>
    %12 = arith.mulf %6, %6 : vector<1x25xf32>
    %13 = arith.subf %11, %12 : vector<1x25xf32>
    %c0_7 = arith.constant 0 : index
    %c0_8 = arith.constant 0 : index
    %14 = vector.load %arg2[%c0_7, %c0_8] : memref<1x25xf32, #tpu.memory_space<vmem>>, vector<1x25xf32>
    %cst_9 = arith.constant 9.99999974E-6 : f32
    %15 = vector.broadcast %cst_9 : f32 to vector<1x25xf32>
    %16 = arith.addf %13, %15 : vector<1x25xf32>
    %17 = math.rsqrt %16 : vector<1x25xf32>
    %18 = arith.mulf %14, %17 : vector<1x25xf32>
    %c0_10 = arith.constant 0 : index
    %c0_11 = arith.constant 0 : index
    %19 = vector.load %arg3[%c0_10, %c0_11] : memref<1x25xf32, #tpu.memory_space<vmem>>, vector<1x25xf32>
    %20 = arith.mulf %6, %18 : vector<1x25xf32>
    %21 = arith.subf %19, %20 : vector<1x25xf32>
    %22 = vector.broadcast %18 : vector<1x25xf32> to vector<128x25xf32>
    %23 = arith.mulf %2, %22 : vector<128x25xf32>
    %24 = vector.broadcast %21 : vector<1x25xf32> to vector<128x25xf32>
    %25 = arith.addf %23, %24 : vector<128x25xf32>
    %cst_12 = arith.constant -1.000000e+00 : f32
    %cst_13 = arith.constant 1.000000e+00 : f32
    %26 = vector.broadcast %cst_12 : f32 to vector<128x25xf32>
    %27 = arith.maximumf %26, %25 : vector<128x25xf32>
    %28 = vector.broadcast %cst_13 : f32 to vector<128x25xf32>
    %29 = arith.minimumf %28, %27 : vector<128x25xf32>
    %30 = vector.extract_strided_slice %29 {offsets = [0, 0], sizes = [32, 25], strides = [1, 1]} : vector<128x25xf32> to vector<32x25xf32>
    %31 = vector.extract_strided_slice %29 {offsets = [32, 0], sizes = [32, 25], strides = [1, 1]} : vector<128x25xf32> to vector<32x25xf32>
    %32 = arith.addf %30, %31 : vector<32x25xf32>
    %33 = vector.extract_strided_slice %29 {offsets = [64, 0], sizes = [32, 25], strides = [1, 1]} : vector<128x25xf32> to vector<32x25xf32>
    %34 = arith.addf %32, %33 : vector<32x25xf32>
    %35 = vector.extract_strided_slice %29 {offsets = [96, 0], sizes = [32, 25], strides = [1, 1]} : vector<128x25xf32> to vector<32x25xf32>
    %36 = arith.addf %34, %35 : vector<32x25xf32>
    %cst_14 = arith.constant 2.500000e-01 : f32
    %37 = vector.broadcast %cst_14 : f32 to vector<32x25xf32>
    %38 = arith.mulf %37, %36 : vector<32x25xf32>
    %39 = arith.truncf %38 : vector<32x25xf32> to vector<32x25xbf16>
    %c0_15 = arith.constant 0 : index
    %c0_16 = arith.constant 0 : index
    %40 = vector.load %arg11[%c0_15, %c0_16] : memref<32x25xbf16, #tpu.memory_space<vmem>>, vector<32x25xbf16>
    tpu.vector_store %arg11[%c0_15, %c0_16], %39 {strides = array<i32>} : memref<32x25xbf16, #tpu.memory_space<vmem>>, vector<32x25xbf16>,
    %cst_17 = arith.constant 0.000000e+00 : f32
    %41 = vector.broadcast %cst_17 : f32 to vector<2x150xf32>
    %c0_18 = arith.constant 0 : index
    %c0_19 = arith.constant 0 : index
    %42 = vector.load %arg11[%c0_18, %c0_19] : memref<32x25xbf16, #tpu.memory_space<vmem>>, vector<2x25xbf16>
    %c0_20 = arith.constant 0 : index
    %c0_21 = arith.constant 0 : index
    %c0_22 = arith.constant 0 : index
    %43 = vector.load %arg4[%c0_20, %c0_21, %c0_22] : memref<16x25x150xbf16, #tpu.memory_space<vmem>>, vector<1x25x150xbf16>
    %44 = vector.shape_cast %43 : vector<1x25x150xbf16> to vector<25x150xbf16>
    %cst_23 = arith.constant dense<0.000000e+00> : vector<2x150xf32>
    %45 = tpu.matmul %42, %44, %cst_23 {dimension_numbers = #tpu.dot_dimension_numbers<[1], [0], [0], [1], [0, 0, 1, 1], [], []>} : vector<2x25xbf16>, vector<25x150xbf16>, vector<2x150xf32> -> vector<2x150xf32>
    %46 = arith.addf %41, %45 : vector<2x150xf32>
    %c2 = arith.constant 2 : index
    %c0_24 = arith.constant 0 : index
    %47 = vector.load %arg11[%c2, %c0_24] : memref<32x25xbf16, #tpu.memory_space<vmem>>, vector<2x25xbf16>
    %c1 = arith.constant 1 : index
    %c0_25 = arith.constant 0 : index
    %c0_26 = arith.constant 0 : index
    %48 = vector.load %arg4[%c1, %c0_25, %c0_26] : memref<16x25x150xbf16, #tpu.memory_space<vmem>>, vector<1x25x150xbf16>
    %49 = vector.shape_cast %48 : vector<1x25x150xbf16> to vector<25x150xbf16>
    %cst_27 = arith.constant dense<0.000000e+00> : vector<2x150xf32>
    %50 = tpu.matmul %47, %49, %cst_27 {dimension_numbers = #tpu.dot_dimension_numbers<[1], [0], [0], [1], [0, 0, 1, 1], [], []>} : vector<2x25xbf16>, vector<25x150xbf16>, vector<2x150xf32> -> vector<2x150xf32>
    %51 = arith.addf %46, %50 : vector<2x150xf32>
    %c4 = arith.constant 4 : index
    %c0_28 = arith.constant 0 : index
    %52 = vector.load %arg11[%c4, %c0_28] : memref<32x25xbf16, #tpu.memory_space<vmem>>, vector<2x25xbf16>
    %c2_29 = arith.constant 2 : index
    %c0_30 = arith.constant 0 : index
    %c0_31 = arith.constant 0 : index
    %53 = vector.load %arg4[%c2_29, %c0_30, %c0_31] : memref<16x25x150xbf16, #tpu.memory_space<vmem>>, vector<1x25x150xbf16>
    %54 = vector.shape_cast %53 : vector<1x25x150xbf16> to vector<25x150xbf16>
    %cst_32 = arith.constant dense<0.000000e+00> : vector<2x150xf32>
    %55 = tpu.matmul %52, %54, %cst_32 {dimension_numbers = #tpu.dot_dimension_numbers<[1], [0], [0], [1], [0, 0, 1, 1], [], []>} : vector<2x25xbf16>, vector<25x150xbf16>, vector<2x150xf32> -> vector<2x150xf32>
    %56 = arith.addf %51, %55 : vector<2x150xf32>
    %c6 = arith.constant 6 : index
    %c0_33 = arith.constant 0 : index
    %57 = vector.load %arg11[%c6, %c0_33] : memref<32x25xbf16, #tpu.memory_space<vmem>>, vector<2x25xbf16>
    %c3 = arith.constant 3 : index
    %c0_34 = arith.constant 0 : index
    %c0_35 = arith.constant 0 : index
    %58 = vector.load %arg4[%c3, %c0_34, %c0_35] : memref<16x25x150xbf16, #tpu.memory_space<vmem>>, vector<1x25x150xbf16>
    %59 = vector.shape_cast %58 : vector<1x25x150xbf16> to vector<25x150xbf16>
    %cst_36 = arith.constant dense<0.000000e+00> : vector<2x150xf32>
    %60 = tpu.matmul %57, %59, %cst_36 {dimension_numbers = #tpu.dot_dimension_numbers<[1], [0], [0], [1], [0, 0, 1, 1], [], []>} : vector<2x25xbf16>, vector<25x150xbf16>, vector<2x150xf32> -> vector<2x150xf32>
    %61 = arith.addf %56, %60 : vector<2x150xf32>
    %c8 = arith.constant 8 : index
    %c0_37 = arith.constant 0 : index
    %62 = vector.load %arg11[%c8, %c0_37] : memref<32x25xbf16, #tpu.memory_space<vmem>>, vector<2x25xbf16>
    %c4_38 = arith.constant 4 : index
    %c0_39 = arith.constant 0 : index
    %c0_40 = arith.constant 0 : index
    %63 = vector.load %arg4[%c4_38, %c0_39, %c0_40] : memref<16x25x150xbf16, #tpu.memory_space<vmem>>, vector<1x25x150xbf16>
    %64 = vector.shape_cast %63 : vector<1x25x150xbf16> to vector<25x150xbf16>
    %cst_41 = arith.constant dense<0.000000e+00> : vector<2x150xf32>
    %65 = tpu.matmul %62, %64, %cst_41 {dimension_numbers = #tpu.dot_dimension_numbers<[1], [0], [0], [1], [0, 0, 1, 1], [], []>} : vector<2x25xbf16>, vector<25x150xbf16>, vector<2x150xf32> -> vector<2x150xf32>
    %66 = arith.addf %61, %65 : vector<2x150xf32>
    %c10 = arith.constant 10 : index
    %c0_42 = arith.constant 0 : index
    %67 = vector.load %arg11[%c10, %c0_42] : memref<32x25xbf16, #tpu.memory_space<vmem>>, vector<2x25xbf16>
    %c5 = arith.constant 5 : index
    %c0_43 = arith.constant 0 : index
    %c0_44 = arith.constant 0 : index
    %68 = vector.load %arg4[%c5, %c0_43, %c0_44] : memref<16x25x150xbf16, #tpu.memory_space<vmem>>, vector<1x25x150xbf16>
    %69 = vector.shape_cast %68 : vector<1x25x150xbf16> to vector<25x150xbf16>
    %cst_45 = arith.constant dense<0.000000e+00> : vector<2x150xf32>
    %70 = tpu.matmul %67, %69, %cst_45 {dimension_numbers = #tpu.dot_dimension_numbers<[1], [0], [0], [1], [0, 0, 1, 1], [], []>} : vector<2x25xbf16>, vector<25x150xbf16>, vector<2x150xf32> -> vector<2x150xf32>
    %71 = arith.addf %66, %70 : vector<2x150xf32>
    %c12 = arith.constant 12 : index
    %c0_46 = arith.constant 0 : index
    %72 = vector.load %arg11[%c12, %c0_46] : memref<32x25xbf16, #tpu.memory_space<vmem>>, vector<2x25xbf16>
    %c6_47 = arith.constant 6 : index
    %c0_48 = arith.constant 0 : index
    %c0_49 = arith.constant 0 : index
    %73 = vector.load %arg4[%c6_47, %c0_48, %c0_49] : memref<16x25x150xbf16, #tpu.memory_space<vmem>>, vector<1x25x150xbf16>
    %74 = vector.shape_cast %73 : vector<1x25x150xbf16> to vector<25x150xbf16>
    %cst_50 = arith.constant dense<0.000000e+00> : vector<2x150xf32>
    %75 = tpu.matmul %72, %74, %cst_50 {dimension_numbers = #tpu.dot_dimension_numbers<[1], [0], [0], [1], [0, 0, 1, 1], [], []>} : vector<2x25xbf16>, vector<25x150xbf16>, vector<2x150xf32> -> vector<2x150xf32>
    %76 = arith.addf %71, %75 : vector<2x150xf32>
    %c14 = arith.constant 14 : index
    %c0_51 = arith.constant 0 : index
    %77 = vector.load %arg11[%c14, %c0_51] : memref<32x25xbf16, #tpu.memory_space<vmem>>, vector<2x25xbf16>
    %c7 = arith.constant 7 : index
    %c0_52 = arith.constant 0 : index
    %c0_53 = arith.constant 0 : index
    %78 = vector.load %arg4[%c7, %c0_52, %c0_53] : memref<16x25x150xbf16, #tpu.memory_space<vmem>>, vector<1x25x150xbf16>
    %79 = vector.shape_cast %78 : vector<1x25x150xbf16> to vector<25x150xbf16>
    %cst_54 = arith.constant dense<0.000000e+00> : vector<2x150xf32>
    %80 = tpu.matmul %77, %79, %cst_54 {dimension_numbers = #tpu.dot_dimension_numbers<[1], [0], [0], [1], [0, 0, 1, 1], [], []>} : vector<2x25xbf16>, vector<25x150xbf16>, vector<2x150xf32> -> vector<2x150xf32>
    %81 = arith.addf %76, %80 : vector<2x150xf32>
    %c16 = arith.constant 16 : index
    %c0_55 = arith.constant 0 : index
    %82 = vector.load %arg11[%c16, %c0_55] : memref<32x25xbf16, #tpu.memory_space<vmem>>, vector<2x25xbf16>
    %c8_56 = arith.constant 8 : index
    %c0_57 = arith.constant 0 : index
    %c0_58 = arith.constant 0 : index
    %83 = vector.load %arg4[%c8_56, %c0_57, %c0_58] : memref<16x25x150xbf16, #tpu.memory_space<vmem>>, vector<1x25x150xbf16>
    %84 = vector.shape_cast %83 : vector<1x25x150xbf16> to vector<25x150xbf16>
    %cst_59 = arith.constant dense<0.000000e+00> : vector<2x150xf32>
    %85 = tpu.matmul %82, %84, %cst_59 {dimension_numbers = #tpu.dot_dimension_numbers<[1], [0], [0], [1], [0, 0, 1, 1], [], []>} : vector<2x25xbf16>, vector<25x150xbf16>, vector<2x150xf32> -> vector<2x150xf32>
    %86 = arith.addf %81, %85 : vector<2x150xf32>
    %c18 = arith.constant 18 : index
    %c0_60 = arith.constant 0 : index
    %87 = vector.load %arg11[%c18, %c0_60] : memref<32x25xbf16, #tpu.memory_space<vmem>>, vector<2x25xbf16>
    %c9 = arith.constant 9 : index
    %c0_61 = arith.constant 0 : index
    %c0_62 = arith.constant 0 : index
    %88 = vector.load %arg4[%c9, %c0_61, %c0_62] : memref<16x25x150xbf16, #tpu.memory_space<vmem>>, vector<1x25x150xbf16>
    %89 = vector.shape_cast %88 : vector<1x25x150xbf16> to vector<25x150xbf16>
    %cst_63 = arith.constant dense<0.000000e+00> : vector<2x150xf32>
    %90 = tpu.matmul %87, %89, %cst_63 {dimension_numbers = #tpu.dot_dimension_numbers<[1], [0], [0], [1], [0, 0, 1, 1], [], []>} : vector<2x25xbf16>, vector<25x150xbf16>, vector<2x150xf32> -> vector<2x150xf32>
    %91 = arith.addf %86, %90 : vector<2x150xf32>
    %c20 = arith.constant 20 : index
    %c0_64 = arith.constant 0 : index
    %92 = vector.load %arg11[%c20, %c0_64] : memref<32x25xbf16, #tpu.memory_space<vmem>>, vector<2x25xbf16>
    %c10_65 = arith.constant 10 : index
    %c0_66 = arith.constant 0 : index
    %c0_67 = arith.constant 0 : index
    %93 = vector.load %arg4[%c10_65, %c0_66, %c0_67] : memref<16x25x150xbf16, #tpu.memory_space<vmem>>, vector<1x25x150xbf16>
    %94 = vector.shape_cast %93 : vector<1x25x150xbf16> to vector<25x150xbf16>
    %cst_68 = arith.constant dense<0.000000e+00> : vector<2x150xf32>
    %95 = tpu.matmul %92, %94, %cst_68 {dimension_numbers = #tpu.dot_dimension_numbers<[1], [0], [0], [1], [0, 0, 1, 1], [], []>} : vector<2x25xbf16>, vector<25x150xbf16>, vector<2x150xf32> -> vector<2x150xf32>
    %96 = arith.addf %91, %95 : vector<2x150xf32>
    %c22 = arith.constant 22 : index
    %c0_69 = arith.constant 0 : index
    %97 = vector.load %arg11[%c22, %c0_69] : memref<32x25xbf16, #tpu.memory_space<vmem>>, vector<2x25xbf16>
    %c11 = arith.constant 11 : index
    %c0_70 = arith.constant 0 : index
    %c0_71 = arith.constant 0 : index
    %98 = vector.load %arg4[%c11, %c0_70, %c0_71] : memref<16x25x150xbf16, #tpu.memory_space<vmem>>, vector<1x25x150xbf16>
    %99 = vector.shape_cast %98 : vector<1x25x150xbf16> to vector<25x150xbf16>
    %cst_72 = arith.constant dense<0.000000e+00> : vector<2x150xf32>
    %100 = tpu.matmul %97, %99, %cst_72 {dimension_numbers = #tpu.dot_dimension_numbers<[1], [0], [0], [1], [0, 0, 1, 1], [], []>} : vector<2x25xbf16>, vector<25x150xbf16>, vector<2x150xf32> -> vector<2x150xf32>
    %101 = arith.addf %96, %100 : vector<2x150xf32>
    %c24 = arith.constant 24 : index
    %c0_73 = arith.constant 0 : index
    %102 = vector.load %arg11[%c24, %c0_73] : memref<32x25xbf16, #tpu.memory_space<vmem>>, vector<2x25xbf16>
    %c12_74 = arith.constant 12 : index
    %c0_75 = arith.constant 0 : index
    %c0_76 = arith.constant 0 : index
    %103 = vector.load %arg4[%c12_74, %c0_75, %c0_76] : memref<16x25x150xbf16, #tpu.memory_space<vmem>>, vector<1x25x150xbf16>
    %104 = vector.shape_cast %103 : vector<1x25x150xbf16> to vector<25x150xbf16>
    %cst_77 = arith.constant dense<0.000000e+00> : vector<2x150xf32>
    %105 = tpu.matmul %102, %104, %cst_77 {dimension_numbers = #tpu.dot_dimension_numbers<[1], [0], [0], [1], [0, 0, 1, 1], [], []>} : vector<2x25xbf16>, vector<25x150xbf16>, vector<2x150xf32> -> vector<2x150xf32>
    %106 = arith.addf %101, %105 : vector<2x150xf32>
    %c26 = arith.constant 26 : index
    %c0_78 = arith.constant 0 : index
    %107 = vector.load %arg11[%c26, %c0_78] : memref<32x25xbf16, #tpu.memory_space<vmem>>, vector<2x25xbf16>
    %c13 = arith.constant 13 : index
    %c0_79 = arith.constant 0 : index
    %c0_80 = arith.constant 0 : index
    %108 = vector.load %arg4[%c13, %c0_79, %c0_80] : memref<16x25x150xbf16, #tpu.memory_space<vmem>>, vector<1x25x150xbf16>
    %109 = vector.shape_cast %108 : vector<1x25x150xbf16> to vector<25x150xbf16>
    %cst_81 = arith.constant dense<0.000000e+00> : vector<2x150xf32>
    %110 = tpu.matmul %107, %109, %cst_81 {dimension_numbers = #tpu.dot_dimension_numbers<[1], [0], [0], [1], [0, 0, 1, 1], [], []>} : vector<2x25xbf16>, vector<25x150xbf16>, vector<2x150xf32> -> vector<2x150xf32>
    %111 = arith.addf %106, %110 : vector<2x150xf32>
    %c28 = arith.constant 28 : index
    %c0_82 = arith.constant 0 : index
    %112 = vector.load %arg11[%c28, %c0_82] : memref<32x25xbf16, #tpu.memory_space<vmem>>, vector<2x25xbf16>
    %c14_83 = arith.constant 14 : index
    %c0_84 = arith.constant 0 : index
    %c0_85 = arith.constant 0 : index
    %113 = vector.load %arg4[%c14_83, %c0_84, %c0_85] : memref<16x25x150xbf16, #tpu.memory_space<vmem>>, vector<1x25x150xbf16>
    %114 = vector.shape_cast %113 : vector<1x25x150xbf16> to vector<25x150xbf16>
    %cst_86 = arith.constant dense<0.000000e+00> : vector<2x150xf32>
    %115 = tpu.matmul %112, %114, %cst_86 {dimension_numbers = #tpu.dot_dimension_numbers<[1], [0], [0], [1], [0, 0, 1, 1], [], []>} : vector<2x25xbf16>, vector<25x150xbf16>, vector<2x150xf32> -> vector<2x150xf32>
    %116 = arith.addf %111, %115 : vector<2x150xf32>
    %c30 = arith.constant 30 : index
    %c0_87 = arith.constant 0 : index
    %117 = vector.load %arg11[%c30, %c0_87] : memref<32x25xbf16, #tpu.memory_space<vmem>>, vector<2x25xbf16>
    %c15 = arith.constant 15 : index
    %c0_88 = arith.constant 0 : index
    %c0_89 = arith.constant 0 : index
    %118 = vector.load %arg4[%c15, %c0_88, %c0_89] : memref<16x25x150xbf16, #tpu.memory_space<vmem>>, vector<1x25x150xbf16>
    %119 = vector.shape_cast %118 : vector<1x25x150xbf16> to vector<25x150xbf16>
    %cst_90 = arith.constant dense<0.000000e+00> : vector<2x150xf32>
    %120 = tpu.matmul %117, %119, %cst_90 {dimension_numbers = #tpu.dot_dimension_numbers<[1], [0], [0], [1], [0, 0, 1, 1], [], []>} : vector<2x25xbf16>, vector<25x150xbf16>, vector<2x150xf32> -> vector<2x150xf32>
    %121 = arith.addf %116, %120 : vector<2x150xf32>
    %cst_91 = arith.constant dense<0.000000e+00> : vector<150xf32>
    %122 = vector.multi_reduction <add>, %121, %cst_91 [0] : vector<2x150xf32> to vector<150xf32>
    %123 = vector.shape_cast %122 : vector<150xf32> to vector<1x150xf32>
    %cst_92 = arith.constant 2.000000e+00 : f32
    %124 = vector.broadcast %cst_92 : f32 to vector<1x150xf32>
    %125 = arith.divf %123, %124 : vector<1x150xf32>
    %126 = arith.mulf %121, %121 : vector<2x150xf32>
    %cst_93 = arith.constant dense<0.000000e+00> : vector<150xf32>
    %127 = vector.multi_reduction <add>, %126, %cst_93 [0] : vector<2x150xf32> to vector<150xf32>
    %128 = vector.shape_cast %127 : vector<150xf32> to vector<1x150xf32>
    %cst_94 = arith.constant 2.000000e+00 : f32
    %129 = vector.broadcast %cst_94 : f32 to vector<1x150xf32>
    %130 = arith.divf %128, %129 : vector<1x150xf32>
    %131 = arith.mulf %125, %125 : vector<1x150xf32>
    %132 = arith.subf %130, %131 : vector<1x150xf32>
    %c0_95 = arith.constant 0 : index
    %c0_96 = arith.constant 0 : index
    %133 = vector.load %arg5[%c0_95, %c0_96] : memref<1x150xf32, #tpu.memory_space<vmem>>, vector<1x150xf32>
    %cst_97 = arith.constant 9.99999974E-6 : f32
    %134 = vector.broadcast %cst_97 : f32 to vector<1x150xf32>
    %135 = arith.addf %132, %134 : vector<1x150xf32>
    %136 = math.rsqrt %135 : vector<1x150xf32>
    %137 = arith.mulf %133, %136 : vector<1x150xf32>
    %138 = vector.broadcast %137 : vector<1x150xf32> to vector<2x150xf32>
    %139 = arith.mulf %121, %138 : vector<2x150xf32>
    %c0_98 = arith.constant 0 : index
    %c0_99 = arith.constant 0 : index
    %140 = vector.load %arg6[%c0_98, %c0_99] : memref<1x150xf32, #tpu.memory_space<vmem>>, vector<1x150xf32>
    %141 = arith.mulf %125, %137 : vector<1x150xf32>
    %142 = arith.subf %140, %141 : vector<1x150xf32>
    %143 = vector.broadcast %142 : vector<1x150xf32> to vector<2x150xf32>
    %144 = arith.addf %139, %143 : vector<2x150xf32>
    %cst_100 = arith.constant -1.000000e+00 : f32
    %cst_101 = arith.constant 1.000000e+00 : f32
    %145 = vector.broadcast %cst_100 : f32 to vector<2x150xf32>
    %146 = arith.maximumf %145, %144 : vector<2x150xf32>
    %147 = vector.broadcast %cst_101 : f32 to vector<2x150xf32>
    %148 = arith.minimumf %147, %146 : vector<2x150xf32>
    %149 = arith.truncf %148 : vector<2x150xf32> to vector<2x150xbf16>
    %c0_102 = arith.constant 0 : index
    %c0_103 = arith.constant 0 : index
    %150 = vector.load %arg7[%c0_102, %c0_103] : memref<150x10xbf16, #tpu.memory_space<vmem>>, vector<150x10xbf16>
    %cst_104 = arith.constant dense<0.000000e+00> : vector<2x10xf32>
    %151 = tpu.matmul %149, %150, %cst_104 {dimension_numbers = #tpu.dot_dimension_numbers<[1], [0], [0], [1], [0, 0, 1, 1], [], []>} : vector<2x150xbf16>, vector<150x10xbf16>, vector<2x10xf32> -> vector<2x10xf32>
    %cst_105 = arith.constant dense<0.000000e+00> : vector<10xf32>
    %152 = vector.multi_reduction <add>, %151, %cst_105 [0] : vector<2x10xf32> to vector<10xf32>
    %153 = vector.shape_cast %152 : vector<10xf32> to vector<1x10xf32>
    %cst_106 = arith.constant 2.000000e+00 : f32
    %154 = vector.broadcast %cst_106 : f32 to vector<1x10xf32>
    %155 = arith.divf %153, %154 : vector<1x10xf32>
    %156 = arith.mulf %151, %151 : vector<2x10xf32>
    %cst_107 = arith.constant dense<0.000000e+00> : vector<10xf32>
    %157 = vector.multi_reduction <add>, %156, %cst_107 [0] : vector<2x10xf32> to vector<10xf32>
    %158 = vector.shape_cast %157 : vector<10xf32> to vector<1x10xf32>
    %cst_108 = arith.constant 2.000000e+00 : f32
    %159 = vector.broadcast %cst_108 : f32 to vector<1x10xf32>
    %160 = arith.divf %158, %159 : vector<1x10xf32>
    %161 = arith.mulf %155, %155 : vector<1x10xf32>
    %162 = arith.subf %160, %161 : vector<1x10xf32>
    %c0_109 = arith.constant 0 : index
    %c0_110 = arith.constant 0 : index
    %163 = vector.load %arg8[%c0_109, %c0_110] : memref<1x10xf32, #tpu.memory_space<vmem>>, vector<1x10xf32>
    %cst_111 = arith.constant 9.99999974E-6 : f32
    %164 = vector.broadcast %cst_111 : f32 to vector<1x10xf32>
    %165 = arith.addf %162, %164 : vector<1x10xf32>
    %166 = math.rsqrt %165 : vector<1x10xf32>
    %167 = arith.mulf %163, %166 : vector<1x10xf32>
    %168 = vector.broadcast %167 : vector<1x10xf32> to vector<2x10xf32>
    %169 = arith.mulf %151, %168 : vector<2x10xf32>
    %c0_112 = arith.constant 0 : index
    %c0_113 = arith.constant 0 : index
    %170 = vector.load %arg9[%c0_112, %c0_113] : memref<1x10xf32, #tpu.memory_space<vmem>>, vector<1x10xf32>
    %171 = arith.mulf %155, %167 : vector<1x10xf32>
    %172 = arith.subf %170, %171 : vector<1x10xf32>
    %173 = vector.broadcast %172 : vector<1x10xf32> to vector<2x10xf32>
    %174 = arith.addf %169, %173 : vector<2x10xf32>
    %cst_114 = arith.constant dense<0xFF800000> : vector<2xf32>
    %175 = vector.multi_reduction <maximumf>, %174, %cst_114 [1] : vector<2x10xf32> to vector<2xf32>
    %176 = vector.shape_cast %175 : vector<2xf32> to vector<2x1xf32>
    %177 = vector.broadcast %176 : vector<2x1xf32> to vector<2x10xf32>
    %178 = arith.subf %174, %177 : vector<2x10xf32>
    %179 = math.exp %178 : vector<2x10xf32>
    %cst_115 = arith.constant dense<0.000000e+00> : vector<2xf32>
    %180 = vector.multi_reduction <add>, %179, %cst_115 [1] : vector<2x10xf32> to vector<2xf32>
    %181 = vector.shape_cast %180 : vector<2xf32> to vector<2x1xf32>
    %182 = math.log %181 : vector<2x1xf32>
    %183 = arith.addf %182, %176 : vector<2x1xf32>
    %184 = vector.broadcast %183 : vector<2x1xf32> to vector<2x10xf32>
    %185 = arith.subf %174, %184 : vector<2x10xf32>
    %c0_116 = arith.constant 0 : index
    %c0_117 = arith.constant 0 : index
    %186 = vector.load %arg10[%c0_116, %c0_117] : memref<2x10xf32, #tpu.memory_space<vmem>>, vector<2x10xf32>
    tpu.vector_store %arg10[%c0_116, %c0_117], %185 {strides = array<i32>} : memref<2x10xf32, #tpu.memory_space<vmem>>, vector<2x10xf32>,
    return
  }
}

</mosaic_0001>

<llo_original>
// kernel: net_forward.2
$region0: #{net_forward.2}
  #allocation0 [shape = 'u32[]', space=smem, size = 0x4, offset = 0x4, fixed_abs, tag = 'smem constant byte address 0x4 - core index']
  #allocation1 [shape = 'u32[72,128]{1,0:T(1,128)}', space=vmem, size = 0x9000, scoped, tag = 'internal scratch']
  %s0 = inlined_call_operand.vmem [shape: bf16[512,9], index: 0, kind: input, shape index: {}]
  %s1 = inlined_call_operand.vmem [shape: bf16[9,3], index: 1, kind: input, shape index: {}]
  %s2 = inlined_call_operand.vmem [shape: f32[1,3], index: 2, kind: input, shape index: {}]
  %s3 = inlined_call_operand.vmem [shape: f32[1,3], index: 3, kind: input, shape index: {}]
  %s4 = inlined_call_operand.vmem [shape: f32[128,3], index: 4, kind: output, shape index: {}]
  %s5 = sld [smem:[#allocation0]]
  $region26: #{net_forward.2} parent=0
    _
  %s7 = ssub.s32 1, %s5
  %s8 = scalar_select 0, %s7, %s5
  // Predicated region
  $region2: #{net_forward.2} parent=0 // pred_check
    _
  $region3: #{net_forward.2} parent=0 // pred_check_branch
    %10 = sbr.rel (0) target = $region5
  $region4: #{net_forward.2} parent=0 // pred_region
    _
  $region5: #{net_forward.2} parent=0 // pred_fallthru
    _
  // Predicated region
  $region6: #{net_forward.2} parent=0 // pred_check
    _
  $region7: #{net_forward.2} parent=0 // pred_check_branch
    %12 = sbr.rel (0) target = $region9
  $region8: #{net_forward.2} parent=0 // pred_region
    _
  $region9: #{net_forward.2} parent=0 // pred_fallthru
    _
  // Predicated region
  $region10: #{net_forward.2} parent=0 // pred_check
    _
  $region11: #{net_forward.2} parent=0 // pred_check_branch
    %14 = sbr.rel (0) target = $region13
  $region12: #{net_forward.2} parent=0 // pred_region
    _
  $region13: #{net_forward.2} parent=0 // pred_fallthru
    _
  // Predicated region
  $region14: #{net_forward.2} parent=0 // pred_check
    _
  $region15: #{net_forward.2} parent=0 // pred_check_branch
    %16 = sbr.rel (0) target = $region17
  $region16: #{net_forward.2} parent=0 // pred_region
    _
  $region17: #{net_forward.2} parent=0 // pred_fallthru
    _
  %v18 = vld [vmem:[%s0] sm:$0xf]
  %v19 = vld [vmem:[%s0 + $0x4] sm:$0xf]
  %v20 = vld [vmem:[%s0 + $0x8] sm:$0xf]
  %v21 = vld [vmem:[%s0 + $0xc] sm:$0xf]
  %v22 = vld [vmem:[%s0 + $0x10] sm:$0xf]
  %v23 = vld [vmem:[%s0 + $0x14] sm:$0xf]
  %v24 = vld [vmem:[%s0 + $0x18] sm:$0xf]
  %v25 = vld [vmem:[%s0 + $0x1c] sm:$0xf]
  %v26 = vld [vmem:[%s0 + $0x20] sm:$0xf]
  %v27 = vld [vmem:[%s0 + $0x24] sm:$0xf]
  %v28 = vld [vmem:[%s0 + $0x28] sm:$0xf]
  %v29 = vld [vmem:[%s0 + $0x2c] sm:$0xf]
  %v30 = vld [vmem:[%s0 + $0x30] sm:$0xf]
  %v31 = vld [vmem:[%s0 + $0x34] sm:$0xf]
  %v32 = vld [vmem:[%s0 + $0x38] sm:$0xf]
  %v33 = vld [vmem:[%s0 + $0x3c] sm:$0xf]
  %v34 = vld [vmem:[%s0 + $0x40] sm:$0xf]
  %v35 = vld [vmem:[%s0 + $0x44] sm:$0xf]
  %v36 = vld [vmem:[%s0 + $0x48] sm:$0xf]
  %v37 = vld [vmem:[%s0 + $0x4c] sm:$0xf]
  %v38 = vld [vmem:[%s0 + $0x50] sm:$0xf]
  %v39 = vld [vmem:[%s0 + $0x54] sm:$0xf]
  %v40 = vld [vmem:[%s0 + $0x58] sm:$0xf]
  %v41 = vld [vmem:[%s0 + $0x5c] sm:$0xf]
  %v42 = vld [vmem:[%s0 + $0x60] sm:$0xf]
  %v43 = vld [vmem:[%s0 + $0x64] sm:$0xf]
  %v44 = vld [vmem:[%s0 + $0x68] sm:$0xf]
  %v45 = vld [vmem:[%s0 + $0x6c] sm:$0xf]
  %v46 = vld [vmem:[%s0 + $0x70] sm:$0xf]
  %v47 = vld [vmem:[%s0 + $0x74] sm:$0xf]
  %v48 = vld [vmem:[%s0 + $0x78] sm:$0xf]
  %v49 = vld [vmem:[%s0 + $0x7c] sm:$0xf]
  %v50 = vld [vmem:[%s0 + $0x80] sm:$0xf]
  %v51 = vld [vmem:[%s0 + $0x84] sm:$0xf]
  %v52 = vld [vmem:[%s0 + $0x88] sm:$0xf]
  %v53 = vld [vmem:[%s0 + $0x8c] sm:$0xf]
  %v54 = vld [vmem:[%s0 + $0x90] sm:$0xf]
  %v55 = vld [vmem:[%s0 + $0x94] sm:$0xf]
  %v56 = vld [vmem:[%s0 + $0x98] sm:$0xf]
  %v57 = vld [vmem:[%s0 + $0x9c] sm:$0xf]
  %v58 = vld [vmem:[%s0 + $0xa0] sm:$0xf]
  %v59 = vld [vmem:[%s0 + $0xa4] sm:$0xf]
  %v60 = vld [vmem:[%s0 + $0xa8] sm:$0xf]
  %v61 = vld [vmem:[%s0 + $0xac] sm:$0xf]
  %v62 = vld [vmem:[%s0 + $0xb0] sm:$0xf]
  %v63 = vld [vmem:[%s0 + $0xb4] sm:$0xf]
  %v64 = vld [vmem:[%s0 + $0xb8] sm:$0xf]
  %v65 = vld [vmem:[%s0 + $0xbc] sm:$0xf]
  %v66 = vld [vmem:[%s0 + $0xc0] sm:$0xf]
  %v67 = vld [vmem:[%s0 + $0xc4] sm:$0xf]
  %v68 = vld [vmem:[%s0 + $0xc8] sm:$0xf]
  %v69 = vld [vmem:[%s0 + $0xcc] sm:$0xf]
  %v70 = vld [vmem:[%s0 + $0xd0] sm:$0xf]
  %v71 = vld [vmem:[%s0 + $0xd4] sm:$0xf]
  %v72 = vld [vmem:[%s0 + $0xd8] sm:$0xf]
  %v73 = vld [vmem:[%s0 + $0xdc] sm:$0xf]
  %v74 = vld [vmem:[%s0 + $0xe0] sm:$0xf]
  %v75 = vld [vmem:[%s0 + $0xe4] sm:$0xf]
  %v76 = vld [vmem:[%s0 + $0xe8] sm:$0xf]
  %v77 = vld [vmem:[%s0 + $0xec] sm:$0xf]
  %v78 = vld [vmem:[%s0 + $0xf0] sm:$0xf]
  %v79 = vld [vmem:[%s0 + $0xf4] sm:$0xf]
  %v80 = vld [vmem:[%s0 + $0xf8] sm:$0xf]
  %v81 = vld [vmem:[%s0 + $0xfc] sm:$0xf]
  %v82 = vld [vmem:[%s1] sm:$0xf]
  %v83 = vld [vmem:[%s1 + $0x4] sm:$0x1]
  %v148 = vunpack.c.l.b16 %v18
  %v149 = vunpack.c.l.b16 %v19
  %v150 = vunpack.c.l.b16 %v20
  %v151 = vunpack.c.l.b16 %v21
  %v152 = vunpack.c.l.b16 %v22
  %v153 = vunpack.c.l.b16 %v23
  %v154 = vunpack.c.l.b16 %v24
  %v155 = vunpack.c.l.b16 %v25
  %v156 = vunpack.c.l.b16 %v26
  %v157 = vunpack.c.l.b16 %v27
  %v158 = vunpack.c.l.b16 %v28
  %v159 = vunpack.c.l.b16 %v29
  %v160 = vunpack.c.l.b16 %v30
  %v161 = vunpack.c.l.b16 %v31
  %v162 = vunpack.c.l.b16 %v32
  %v163 = vunpack.c.l.b16 %v33
  %v164 = vunpack.c.l.b16 %v34
  %v165 = vunpack.c.l.b16 %v35
  %v166 = vunpack.c.l.b16 %v36
  %v167 = vunpack.c.l.b16 %v37
  %v168 = vunpack.c.l.b16 %v38
  %v169 = vunpack.c.l.b16 %v39
  %v170 = vunpack.c.l.b16 %v40
  %v171 = vunpack.c.l.b16 %v41
  %v172 = vunpack.c.l.b16 %v42
  %v173 = vunpack.c.l.b16 %v43
  %v174 = vunpack.c.l.b16 %v44
  %v175 = vunpack.c.l.b16 %v45
  %v176 = vunpack.c.l.b16 %v46
  %v177 = vunpack.c.l.b16 %v47
  %v178 = vunpack.c.l.b16 %v48
  %v179 = vunpack.c.l.b16 %v49
  %v180 = vunpack.c.l.b16 %v50
  %v181 = vunpack.c.l.b16 %v51
  %v182 = vunpack.c.l.b16 %v52
  %v183 = vunpack.c.l.b16 %v53
  %v184 = vunpack.c.l.b16 %v54
  %v185 = vunpack.c.l.b16 %v55
  %v186 = vunpack.c.l.b16 %v56
  %v187 = vunpack.c.l.b16 %v57
  %v188 = vunpack.c.l.b16 %v58
  %v189 = vunpack.c.l.b16 %v59
  %v190 = vunpack.c.l.b16 %v60
  %v191 = vunpack.c.l.b16 %v61
  %v192 = vunpack.c.l.b16 %v62
  %v193 = vunpack.c.l.b16 %v63
  %v194 = vunpack.c.l.b16 %v64
  %v195 = vunpack.c.l.b16 %v65
  %v196 = vunpack.c.l.b16 %v66
  %v197 = vunpack.c.l.b16 %v67
  %v198 = vunpack.c.l.b16 %v68
  %v199 = vunpack.c.l.b16 %v69
  %v200 = vunpack.c.l.b16 %v70
  %v201 = vunpack.c.l.b16 %v71
  %v202 = vunpack.c.l.b16 %v72
  %v203 = vunpack.c.l.b16 %v73
  %v204 = vunpack.c.l.b16 %v74
  %v205 = vunpack.c.l.b16 %v75
  %v206 = vunpack.c.l.b16 %v76
  %v207 = vunpack.c.l.b16 %v77
  %v208 = vunpack.c.l.b16 %v78
  %v209 = vunpack.c.l.b16 %v79
  %v210 = vunpack.c.l.b16 %v80
  %v211 = vunpack.c.l.b16 %v81
  %v212 = vpack.c.b16 %v149, %v148
  %v213 = vpack.c.b16 %v151, %v150
  %v214 = vpack.c.b16 %v153, %v152
  %v215 = vpack.c.b16 %v155, %v154
  %v216 = vpack.c.b16 %v157, %v156
  %v217 = vpack.c.b16 %v159, %v158
  %v218 = vpack.c.b16 %v161, %v160
  %v219 = vpack.c.b16 %v163, %v162
  %v220 = vpack.c.b16 %v165, %v164
  %v221 = vpack.c.b16 %v167, %v166
  %v222 = vpack.c.b16 %v169, %v168
  %v223 = vpack.c.b16 %v171, %v170
  %v224 = vpack.c.b16 %v173, %v172
  %v225 = vpack.c.b16 %v175, %v174
  %v226 = vpack.c.b16 %v177, %v176
  %v227 = vpack.c.b16 %v179, %v178
  %v228 = vpack.c.b16 %v181, %v180
  %v229 = vpack.c.b16 %v183, %v182
  %v230 = vpack.c.b16 %v185, %v184
  %v231 = vpack.c.b16 %v187, %v186
  %v232 = vpack.c.b16 %v189, %v188
  %v233 = vpack.c.b16 %v191, %v190
  %v234 = vpack.c.b16 %v193, %v192
  %v235 = vpack.c.b16 %v195, %v194
  %v236 = vpack.c.b16 %v197, %v196
  %v237 = vpack.c.b16 %v199, %v198
  %v238 = vpack.c.b16 %v201, %v200
  %v239 = vpack.c.b16 %v203, %v202
  %v240 = vpack.c.b16 %v205, %v204
  %v241 = vpack.c.b16 %v207, %v206
  %v242 = vpack.c.b16 %v209, %v208
  %v243 = vpack.c.b16 %v211, %v210
  %v246 = vunpack.c.l.b16 %v82
  %v247 = vunpack.c.l.b16 %v83
  %v248 = vpack.c.b16 %v247, %v246
  %vm249 = vcmask 72704
  %v251 = vsel %vm249, %v212, 0
  %v254 = vsel %vm249, %v213, 0
  %v257 = vsel %vm249, %v214, 0
  %v260 = vsel %vm249, %v215, 0
  %v263 = vsel %vm249, %v216, 0
  %v266 = vsel %vm249, %v217, 0
  %v269 = vsel %vm249, %v218, 0
  %v272 = vsel %vm249, %v219, 0
  %v275 = vsel %vm249, %v220, 0
  %v278 = vsel %vm249, %v221, 0
  %v281 = vsel %vm249, %v222, 0
  %v284 = vsel %vm249, %v223, 0
  %v287 = vsel %vm249, %v224, 0
  %v290 = vsel %vm249, %v225, 0
  %v293 = vsel %vm249, %v226, 0
  %v296 = vsel %vm249, %v227, 0
  %v299 = vsel %vm249, %v228, 0
  %v302 = vsel %vm249, %v229, 0
  %v305 = vsel %vm249, %v230, 0
  %v308 = vsel %vm249, %v231, 0
  %v311 = vsel %vm249, %v232, 0
  %v314 = vsel %vm249, %v233, 0
  %v317 = vsel %vm249, %v234, 0
  %v320 = vsel %vm249, %v235, 0
  %v323 = vsel %vm249, %v236, 0
  %v326 = vsel %vm249, %v237, 0
  %v329 = vsel %vm249, %v238, 0
  %v332 = vsel %vm249, %v239, 0
  %v335 = vsel %vm249, %v240, 0
  %v338 = vsel %vm249, %v241, 0
  %v341 = vsel %vm249, %v242, 0
  %v344 = vsel %vm249, %v243, 0
  %vm346 = vcmask 1043456
  %vm347 = vcmask 1044480
  %v348 = vsel %vm346, 4294967295, 65535
  %v349 = vsel %vm347, %v348, 0
  %v351 = vand.u32 %v248, %v349
  %353 = vmatpush.bf16.msra.mxu0 0
  %354 = vmatpush.bf16.msra.mxu0 0
  %355 = vmatpush.bf16.msra.mxu0 0
  %356 = vmatpush.bf16.msra.mxu0 0
  %357 = vmatpush.bf16.msra.mxu0 0
  %358 = vmatpush.bf16.msra.mxu0 0
  %359 = vmatpush.bf16.msra.mxu0 0
  %360 = vmatpush.bf16.msra.mxu0 %v351
  %361 = vmatmul.bf16.gmra.mxu0 %v251
  %v362 = vpop.f32.mrf.mxu0
  %v363 = vadd.f32 0.0, %v362
  %v364 = vpop.f32.mrf.mxu0
  %v365 = vadd.f32 0.0, %v364
  %366 = vmatmul.bf16.gmra.mxu0 %v254
  %v367 = vpop.f32.mrf.mxu0
  %v368 = vadd.f32 0.0, %v367
  %v369 = vpop.f32.mrf.mxu0
  %v370 = vadd.f32 0.0, %v369
  %371 = vmatmul.bf16.gmra.mxu0 %v257
  %v372 = vpop.f32.mrf.mxu0
  %v373 = vadd.f32 0.0, %v372
  %v374 = vpop.f32.mrf.mxu0
  %v375 = vadd.f32 0.0, %v374
  %376 = vmatmul.bf16.gmra.mxu0 %v260
  %v377 = vpop.f32.mrf.mxu0
  %v378 = vadd.f32 0.0, %v377
  %v379 = vpop.f32.mrf.mxu0
  %v380 = vadd.f32 0.0, %v379
  %381 = vmatmul.bf16.gmra.mxu0 %v263
  %v382 = vpop.f32.mrf.mxu0
  %v383 = vadd.f32 0.0, %v382
  %v384 = vpop.f32.mrf.mxu0
  %v385 = vadd.f32 0.0, %v384
  %386 = vmatmul.bf16.gmra.mxu0 %v266
  %v387 = vpop.f32.mrf.mxu0
  %v388 = vadd.f32 0.0, %v387
  %v389 = vpop.f32.mrf.mxu0
  %v390 = vadd.f32 0.0, %v389
  %391 = vmatmul.bf16.gmra.mxu0 %v269
  %v392 = vpop.f32.mrf.mxu0
  %v393 = vadd.f32 0.0, %v392
  %v394 = vpop.f32.mrf.mxu0
  %v395 = vadd.f32 0.0, %v394
  %396 = vmatmul.bf16.gmra.mxu0 %v272
  %v397 = vpop.f32.mrf.mxu0
  %v398 = vadd.f32 0.0, %v397
  %v399 = vpop.f32.mrf.mxu0
  %v400 = vadd.f32 0.0, %v399
  %401 = vmatmul.bf16.gmra.mxu0 %v275
  %v402 = vpop.f32.mrf.mxu0
  %v403 = vadd.f32 0.0, %v402
  %v404 = vpop.f32.mrf.mxu0
  %v405 = vadd.f32 0.0, %v404
  %406 = vmatmul.bf16.gmra.mxu0 %v278
  %v407 = vpop.f32.mrf.mxu0
  %v408 = vadd.f32 0.0, %v407
  %v409 = vpop.f32.mrf.mxu0
  %v410 = vadd.f32 0.0, %v409
  %411 = vmatmul.bf16.gmra.mxu0 %v281
  %v412 = vpop.f32.mrf.mxu0
  %v413 = vadd.f32 0.0, %v412
  %v414 = vpop.f32.mrf.mxu0
  %v415 = vadd.f32 0.0, %v414
  %416 = vmatmul.bf16.gmra.mxu0 %v284
  %v417 = vpop.f32.mrf.mxu0
  %v418 = vadd.f32 0.0, %v417
  %v419 = vpop.f32.mrf.mxu0
  %v420 = vadd.f32 0.0, %v419
  %421 = vmatmul.bf16.gmra.mxu0 %v287
  %v422 = vpop.f32.mrf.mxu0
  %v423 = vadd.f32 0.0, %v422
  %v424 = vpop.f32.mrf.mxu0
  %v425 = vadd.f32 0.0, %v424
  %426 = vmatmul.bf16.gmra.mxu0 %v290
  %v427 = vpop.f32.mrf.mxu0
  %v428 = vadd.f32 0.0, %v427
  %v429 = vpop.f32.mrf.mxu0
  %v430 = vadd.f32 0.0, %v429
  %431 = vmatmul.bf16.gmra.mxu0 %v293
  %v432 = vpop.f32.mrf.mxu0
  %v433 = vadd.f32 0.0, %v432
  %v434 = vpop.f32.mrf.mxu0
  %v435 = vadd.f32 0.0, %v434
  %436 = vmatmul.bf16.gmra.mxu0 %v296
  %v437 = vpop.f32.mrf.mxu0
  %v438 = vadd.f32 0.0, %v437
  %v439 = vpop.f32.mrf.mxu0
  %v440 = vadd.f32 0.0, %v439
  %441 = vmatmul.bf16.gmra.mxu0 %v299
  %v442 = vpop.f32.mrf.mxu0
  %v443 = vadd.f32 0.0, %v442
  %v444 = vpop.f32.mrf.mxu0
  %v445 = vadd.f32 0.0, %v444
  %446 = vmatmul.bf16.gmra.mxu0 %v302
  %v447 = vpop.f32.mrf.mxu0
  %v448 = vadd.f32 0.0, %v447
  %v449 = vpop.f32.mrf.mxu0
  %v450 = vadd.f32 0.0, %v449
  %451 = vmatmul.bf16.gmra.mxu0 %v305
  %v452 = vpop.f32.mrf.mxu0
  %v453 = vadd.f32 0.0, %v452
  %v454 = vpop.f32.mrf.mxu0
  %v455 = vadd.f32 0.0, %v454
  %456 = vmatmul.bf16.gmra.mxu0 %v308
  %v457 = vpop.f32.mrf.mxu0
  %v458 = vadd.f32 0.0, %v457
  %v459 = vpop.f32.mrf.mxu0
  %v460 = vadd.f32 0.0, %v459
  %461 = vmatmul.bf16.gmra.mxu0 %v311
  %v462 = vpop.f32.mrf.mxu0
  %v463 = vadd.f32 0.0, %v462
  %v464 = vpop.f32.mrf.mxu0
  %v465 = vadd.f32 0.0, %v464
  %466 = vmatmul.bf16.gmra.mxu0 %v314
  %v467 = vpop.f32.mrf.mxu0
  %v468 = vadd.f32 0.0, %v467
  %v469 = vpop.f32.mrf.mxu0
  %v470 = vadd.f32 0.0, %v469
  %471 = vmatmul.bf16.gmra.mxu0 %v317
  %v472 = vpop.f32.mrf.mxu0
  %v473 = vadd.f32 0.0, %v472
  %v474 = vpop.f32.mrf.mxu0
  %v475 = vadd.f32 0.0, %v474
  %476 = vmatmul.bf16.gmra.mxu0 %v320
  %v477 = vpop.f32.mrf.mxu0
  %v478 = vadd.f32 0.0, %v477
  %v479 = vpop.f32.mrf.mxu0
  %v480 = vadd.f32 0.0, %v479
  %481 = vmatmul.bf16.gmra.mxu0 %v323
  %v482 = vpop.f32.mrf.mxu0
  %v483 = vadd.f32 0.0, %v482
  %v484 = vpop.f32.mrf.mxu0
  %v485 = vadd.f32 0.0, %v484
  %486 = vmatmul.bf16.gmra.mxu0 %v326
  %v487 = vpop.f32.mrf.mxu0
  %v488 = vadd.f32 0.0, %v487
  %v489 = vpop.f32.mrf.mxu0
  %v490 = vadd.f32 0.0, %v489
  %491 = vmatmul.bf16.gmra.mxu0 %v329
  %v492 = vpop.f32.mrf.mxu0
  %v493 = vadd.f32 0.0, %v492
  %v494 = vpop.f32.mrf.mxu0
  %v495 = vadd.f32 0.0, %v494
  %496 = vmatmul.bf16.gmra.mxu0 %v332
  %v497 = vpop.f32.mrf.mxu0
  %v498 = vadd.f32 0.0, %v497
  %v499 = vpop.f32.mrf.mxu0
  %v500 = vadd.f32 0.0, %v499
  %501 = vmatmul.bf16.gmra.mxu0 %v335
  %v502 = vpop.f32.mrf.mxu0
  %v503 = vadd.f32 0.0, %v502
  %v504 = vpop.f32.mrf.mxu0
  %v505 = vadd.f32 0.0, %v504
  %506 = vmatmul.bf16.gmra.mxu0 %v338
  %v507 = vpop.f32.mrf.mxu0
  %v508 = vadd.f32 0.0, %v507
  %v509 = vpop.f32.mrf.mxu0
  %v510 = vadd.f32 0.0, %v509
  %511 = vmatmul.bf16.gmra.mxu0 %v341
  %v512 = vpop.f32.mrf.mxu0
  %v513 = vadd.f32 0.0, %v512
  %v514 = vpop.f32.mrf.mxu0
  %v515 = vadd.f32 0.0, %v514
  %516 = vmatmul.bf16.gmra.mxu0 %v344
  %v517 = vpop.f32.mrf.mxu0
  %v518 = vadd.f32 0.0, %v517
  %v519 = vpop.f32.mrf.mxu0
  %v520 = vadd.f32 0.0, %v519
  %521 = vdwg.mxu0
  %vm522 = vcmask 23552
  %v523 = vsel %vm522, %v363, 0.0
  %v524 = vsel %vm522, %v365, 0.0
  %v525 = vadd.f32 %v523, %v524
  %v526 = vsel %vm522, %v368, 0.0
  %v527 = vadd.f32 %v525, %v526
  %v528 = vsel %vm522, %v370, 0.0
  %v529 = vadd.f32 %v527, %v528
  %v530 = vsel %vm522, %v373, 0.0
  %v531 = vadd.f32 %v529, %v530
  %v532 = vsel %vm522, %v375, 0.0
  %v533 = vadd.f32 %v531, %v532
  %v534 = vsel %vm522, %v378, 0.0
  %v535 = vadd.f32 %v533, %v534
  %v536 = vsel %vm522, %v380, 0.0
  %v537 = vadd.f32 %v535, %v536
  %v538 = vsel %vm522, %v383, 0.0
  %v539 = vadd.f32 %v537, %v538
  %v540 = vsel %vm522, %v385, 0.0
  %v541 = vadd.f32 %v539, %v540
  %v542 = vsel %vm522, %v388, 0.0
  %v543 = vadd.f32 %v541, %v542
  %v544 = vsel %vm522, %v390, 0.0
  %v545 = vadd.f32 %v543, %v544
  %v546 = vsel %vm522, %v393, 0.0
  %v547 = vadd.f32 %v545, %v546
  %v548 = vsel %vm522, %v395, 0.0
  %v549 = vadd.f32 %v547, %v548
  %v550 = vsel %vm522, %v398, 0.0
  %v551 = vadd.f32 %v549, %v550
  %v552 = vsel %vm522, %v400, 0.0
  %v553 = vadd.f32 %v551, %v552
  %v554 = vsel %vm522, %v403, 0.0
  %v555 = vadd.f32 %v553, %v554
  %v556 = vsel %vm522, %v405, 0.0
  %v557 = vadd.f32 %v555, %v556
  %v558 = vsel %vm522, %v408, 0.0
  %v559 = vadd.f32 %v557, %v558
  %v560 = vsel %vm522, %v410, 0.0
  %v561 = vadd.f32 %v559, %v560
  %v562 = vsel %vm522, %v413, 0.0
  %v563 = vadd.f32 %v561, %v562
  %v564 = vsel %vm522, %v415, 0.0
  %v565 = vadd.f32 %v563, %v564
  %v566 = vsel %vm522, %v418, 0.0
  %v567 = vadd.f32 %v565, %v566
  %v568 = vsel %vm522, %v420, 0.0
  %v569 = vadd.f32 %v567, %v568
  %v570 = vsel %vm522, %v423, 0.0
  %v571 = vadd.f32 %v569, %v570
  %v572 = vsel %vm522, %v425, 0.0
  %v573 = vadd.f32 %v571, %v572
  %v574 = vsel %vm522, %v428, 0.0
  %v575 = vadd.f32 %v573, %v574
  %v576 = vsel %vm522, %v430, 0.0
  %v577 = vadd.f32 %v575, %v576
  %v578 = vsel %vm522, %v433, 0.0
  %v579 = vadd.f32 %v577, %v578
  %v580 = vsel %vm522, %v435, 0.0
  %v581 = vadd.f32 %v579, %v580
  %v582 = vsel %vm522, %v438, 0.0
  %v583 = vadd.f32 %v581, %v582
  %v584 = vsel %vm522, %v440, 0.0
  %v585 = vadd.f32 %v583, %v584
  %v586 = vsel %vm522, %v443, 0.0
  %v587 = vadd.f32 %v585, %v586
  %v588 = vsel %vm522, %v445, 0.0
  %v589 = vadd.f32 %v587, %v588
  %v590 = vsel %vm522, %v448, 0.0
  %v591 = vadd.f32 %v589, %v590
  %v592 = vsel %vm522, %v450, 0.0
  %v593 = vadd.f32 %v591, %v592
  %v594 = vsel %vm522, %v453, 0.0
  %v595 = vadd.f32 %v593, %v594
  %v596 = vsel %vm522, %v455, 0.0
  %v597 = vadd.f32 %v595, %v596
  %v598 = vsel %vm522, %v458, 0.0
  %v599 = vadd.f32 %v597, %v598
  %v600 = vsel %vm522, %v460, 0.0
  %v601 = vadd.f32 %v599, %v600
  %v602 = vsel %vm522, %v463, 0.0
  %v603 = vadd.f32 %v601, %v602
  %v604 = vsel %vm522, %v465, 0.0
  %v605 = vadd.f32 %v603, %v604
  %v606 = vsel %vm522, %v468, 0.0
  %v607 = vadd.f32 %v605, %v606
  %v608 = vsel %vm522, %v470, 0.0
  %v609 = vadd.f32 %v607, %v608
  %v610 = vsel %vm522, %v473, 0.0
  %v611 = vadd.f32 %v609, %v610
  %v612 = vsel %vm522, %v475, 0.0
  %v613 = vadd.f32 %v611, %v612
  %v614 = vsel %vm522, %v478, 0.0
  %v615 = vadd.f32 %v613, %v614
  %v616 = vsel %vm522, %v480, 0.0
  %v617 = vadd.f32 %v615, %v616
  %v618 = vsel %vm522, %v483, 0.0
  %v619 = vadd.f32 %v617, %v618
  %v620 = vsel %vm522, %v485, 0.0
  %v621 = vadd.f32 %v619, %v620
  %v622 = vsel %vm522, %v488, 0.0
  %v623 = vadd.f32 %v621, %v622
  %v624 = vsel %vm522, %v490, 0.0
  %v625 = vadd.f32 %v623, %v624
  %v626 = vsel %vm522, %v493, 0.0
  %v627 = vadd.f32 %v625, %v626
  %v628 = vsel %vm522, %v495, 0.0
  %v629 = vadd.f32 %v627, %v628
  %v630 = vsel %vm522, %v498, 0.0
  %v631 = vadd.f32 %v629, %v630
  %v632 = vsel %vm522, %v500, 0.0
  %v633 = vadd.f32 %v631, %v632
  %v634 = vsel %vm522, %v503, 0.0
  %v635 = vadd.f32 %v633, %v634
  %v636 = vsel %vm522, %v505, 0.0
  %v637 = vadd.f32 %v635, %v636
  %v638 = vsel %vm522, %v508, 0.0
  %v639 = vadd.f32 %v637, %v638
  %v640 = vsel %vm522, %v510, 0.0
  %v641 = vadd.f32 %v639, %v640
  %v642 = vsel %vm522, %v513, 0.0
  %v643 = vadd.f32 %v641, %v642
  %v644 = vsel %vm522, %v515, 0.0
  %v645 = vadd.f32 %v643, %v644
  %v646 = vsel %vm522, %v518, 0.0
  %v647 = vadd.f32 %v645, %v646
  %v648 = vsel %vm522, %v520, 0.0
  %v649 = vadd.f32 %v647, %v648
  %v650 = vrot.slane %v649, 4
  %v651 = vadd.f32 %v649, %v650
  %v652 = vrot.slane %v651, 2
  %v653 = vadd.f32 %v651, %v652
  %v654 = vrot.slane %v653, 1
  %v655 = vadd.f32 %v653, %v654
  %v656 = vmul.f32 %v655, 0.001953125
  %v657 = vmul.f32 %v363, %v363
  %v658 = vmul.f32 %v365, %v365
  %v659 = vmul.f32 %v368, %v368
  %v660 = vmul.f32 %v370, %v370
  %v661 = vmul.f32 %v373, %v373
  %v662 = vmul.f32 %v375, %v375
  %v663 = vmul.f32 %v378, %v378
  %v664 = vmul.f32 %v380, %v380
  %v665 = vmul.f32 %v383, %v383
  %v666 = vmul.f32 %v385, %v385
  %v667 = vmul.f32 %v388, %v388
  %v668 = vmul.f32 %v390, %v390
  %v669 = vmul.f32 %v393, %v393
  %v670 = vmul.f32 %v395, %v395
  %v671 = vmul.f32 %v398, %v398
  %v672 = vmul.f32 %v400, %v400
  %v673 = vmul.f32 %v403, %v403
  %v674 = vmul.f32 %v405, %v405
  %v675 = vmul.f32 %v408, %v408
  %v676 = vmul.f32 %v410, %v410
  %v677 = vmul.f32 %v413, %v413
  %v678 = vmul.f32 %v415, %v415
  %v679 = vmul.f32 %v418, %v418
  %v680 = vmul.f32 %v420, %v420
  %v681 = vmul.f32 %v423, %v423
  %v682 = vmul.f32 %v425, %v425
  %v683 = vmul.f32 %v428, %v428
  %v684 = vmul.f32 %v430, %v430
  %v685 = vmul.f32 %v433, %v433
  %v686 = vmul.f32 %v435, %v435
  %v687 = vmul.f32 %v438, %v438
  %v688 = vmul.f32 %v440, %v440
  %v689 = vmul.f32 %v443, %v443
  %v690 = vmul.f32 %v445, %v445
  %v691 = vmul.f32 %v448, %v448
  %v692 = vmul.f32 %v450, %v450
  %v693 = vmul.f32 %v453, %v453
  %v694 = vmul.f32 %v455, %v455
  %v695 = vmul.f32 %v458, %v458
  %v696 = vmul.f32 %v460, %v460
  %v697 = vmul.f32 %v463, %v463
  %v698 = vmul.f32 %v465, %v465
  %v699 = vmul.f32 %v468, %v468
  %v700 = vmul.f32 %v470, %v470
  %v701 = vmul.f32 %v473, %v473
  %v702 = vmul.f32 %v475, %v475
  %v703 = vmul.f32 %v478, %v478
  %v704 = vmul.f32 %v480, %v480
  %v705 = vmul.f32 %v483, %v483
  %v706 = vmul.f32 %v485, %v485
  %v707 = vmul.f32 %v488, %v488
  %v708 = vmul.f32 %v490, %v490
  %v709 = vmul.f32 %v493, %v493
  %v710 = vmul.f32 %v495, %v495
  %v711 = vmul.f32 %v498, %v498
  %v712 = vmul.f32 %v500, %v500
  %v713 = vmul.f32 %v503, %v503
  %v714 = vmul.f32 %v505, %v505
  %v715 = vmul.f32 %v508, %v508
  %v716 = vmul.f32 %v510, %v510
  %v717 = vmul.f32 %v513, %v513
  %v718 = vmul.f32 %v515, %v515
  %v719 = vmul.f32 %v518, %v518
  %v720 = vmul.f32 %v520, %v520
  %v721 = vsel %vm522, %v657, 0.0
  %v722 = vsel %vm522, %v658, 0.0
  %v723 = vadd.f32 %v721, %v722
  %v724 = vsel %vm522, %v659, 0.0
  %v725 = vadd.f32 %v723, %v724
  %v726 = vsel %vm522, %v660, 0.0
  %v727 = vadd.f32 %v725, %v726
  %v728 = vsel %vm522, %v661, 0.0
  %v729 = vadd.f32 %v727, %v728
  %v730 = vsel %vm522, %v662, 0.0
  %v731 = vadd.f32 %v729, %v730
  %v732 = vsel %vm522, %v663, 0.0
  %v733 = vadd.f32 %v731, %v732
  %v734 = vsel %vm522, %v664, 0.0
  %v735 = vadd.f32 %v733, %v734
  %v736 = vsel %vm522, %v665, 0.0
  %v737 = vadd.f32 %v735, %v736
  %v738 = vsel %vm522, %v666, 0.0
  %v739 = vadd.f32 %v737, %v738
  %v740 = vsel %vm522, %v667, 0.0
  %v741 = vadd.f32 %v739, %v740
  %v742 = vsel %vm522, %v668, 0.0
  %v743 = vadd.f32 %v741, %v742
  %v744 = vsel %vm522, %v669, 0.0
  %v745 = vadd.f32 %v743, %v744
  %v746 = vsel %vm522, %v670, 0.0
  %v747 = vadd.f32 %v745, %v746
  %v748 = vsel %vm522, %v671, 0.0
  %v749 = vadd.f32 %v747, %v748
  %v750 = vsel %vm522, %v672, 0.0
  %v751 = vadd.f32 %v749, %v750
  %v752 = vsel %vm522, %v673, 0.0
  %v753 = vadd.f32 %v751, %v752
  %v754 = vsel %vm522, %v674, 0.0
  %v755 = vadd.f32 %v753, %v754
  %v756 = vsel %vm522, %v675, 0.0
  %v757 = vadd.f32 %v755, %v756
  %v758 = vsel %vm522, %v676, 0.0
  %v759 = vadd.f32 %v757, %v758
  %v760 = vsel %vm522, %v677, 0.0
  %v761 = vadd.f32 %v759, %v760
  %v762 = vsel %vm522, %v678, 0.0
  %v763 = vadd.f32 %v761, %v762
  %v764 = vsel %vm522, %v679, 0.0
  %v765 = vadd.f32 %v763, %v764
  %v766 = vsel %vm522, %v680, 0.0
  %v767 = vadd.f32 %v765, %v766
  %v768 = vsel %vm522, %v681, 0.0
  %v769 = vadd.f32 %v767, %v768
  %v770 = vsel %vm522, %v682, 0.0
  %v771 = vadd.f32 %v769, %v770
  %v772 = vsel %vm522, %v683, 0.0
  %v773 = vadd.f32 %v771, %v772
  %v774 = vsel %vm522, %v684, 0.0
  %v775 = vadd.f32 %v773, %v774
  %v776 = vsel %vm522, %v685, 0.0
  %v777 = vadd.f32 %v775, %v776
  %v778 = vsel %vm522, %v686, 0.0
  %v779 = vadd.f32 %v777, %v778
  %v780 = vsel %vm522, %v687, 0.0
  %v781 = vadd.f32 %v779, %v780
  %v782 = vsel %vm522, %v688, 0.0
  %v783 = vadd.f32 %v781, %v782
  %v784 = vsel %vm522, %v689, 0.0
  %v785 = vadd.f32 %v783, %v784
  %v786 = vsel %vm522, %v690, 0.0
  %v787 = vadd.f32 %v785, %v786
  %v788 = vsel %vm522, %v691, 0.0
  %v789 = vadd.f32 %v787, %v788
  %v790 = vsel %vm522, %v692, 0.0
  %v791 = vadd.f32 %v789, %v790
  %v792 = vsel %vm522, %v693, 0.0
  %v793 = vadd.f32 %v791, %v792
  %v794 = vsel %vm522, %v694, 0.0
  %v795 = vadd.f32 %v793, %v794
  %v796 = vsel %vm522, %v695, 0.0
  %v797 = vadd.f32 %v795, %v796
  %v798 = vsel %vm522, %v696, 0.0
  %v799 = vadd.f32 %v797, %v798
  %v800 = vsel %vm522, %v697, 0.0
  %v801 = vadd.f32 %v799, %v800
  %v802 = vsel %vm522, %v698, 0.0
  %v803 = vadd.f32 %v801, %v802
  %v804 = vsel %vm522, %v699, 0.0
  %v805 = vadd.f32 %v803, %v804
  %v806 = vsel %vm522, %v700, 0.0
  %v807 = vadd.f32 %v805, %v806
  %v808 = vsel %vm522, %v701, 0.0
  %v809 = vadd.f32 %v807, %v808
  %v810 = vsel %vm522, %v702, 0.0
  %v811 = vadd.f32 %v809, %v810
  %v812 = vsel %vm522, %v703, 0.0
  %v813 = vadd.f32 %v811, %v812
  %v814 = vsel %vm522, %v704, 0.0
  %v815 = vadd.f32 %v813, %v814
  %v816 = vsel %vm522, %v705, 0.0
  %v817 = vadd.f32 %v815, %v816
  %v818 = vsel %vm522, %v706, 0.0
  %v819 = vadd.f32 %v817, %v818
  %v820 = vsel %vm522, %v707, 0.0
  %v821 = vadd.f32 %v819, %v820
  %v822 = vsel %vm522, %v708, 0.0
  %v823 = vadd.f32 %v821, %v822
  %v824 = vsel %vm522, %v709, 0.0
  %v825 = vadd.f32 %v823, %v824
  %v826 = vsel %vm522, %v710, 0.0
  %v827 = vadd.f32 %v825, %v826
  %v828 = vsel %vm522, %v711, 0.0
  %v829 = vadd.f32 %v827, %v828
  %v830 = vsel %vm522, %v712, 0.0
  %v831 = vadd.f32 %v829, %v830
  %v832 = vsel %vm522, %v713, 0.0
  %v833 = vadd.f32 %v831, %v832
  %v834 = vsel %vm522, %v714, 0.0
  %v835 = vadd.f32 %v833, %v834
  %v836 = vsel %vm522, %v715, 0.0
  %v837 = vadd.f32 %v835, %v836
  %v838 = vsel %vm522, %v716, 0.0
  %v839 = vadd.f32 %v837, %v838
  %v840 = vsel %vm522, %v717, 0.0
  %v841 = vadd.f32 %v839, %v840
  %v842 = vsel %vm522, %v718, 0.0
  %v843 = vadd.f32 %v841, %v842
  %v844 = vsel %vm522, %v719, 0.0
  %v845 = vadd.f32 %v843, %v844
  %v846 = vsel %vm522, %v720, 0.0
  %v847 = vadd.f32 %v845, %v846
  %v848 = vrot.slane %v847, 4
  %v849 = vadd.f32 %v847, %v848
  %v850 = vrot.slane %v849, 2
  %v851 = vadd.f32 %v849, %v850
  %v852 = vrot.slane %v851, 1
  %v853 = vadd.f32 %v851, %v852
  %v854 = vmul.f32 %v853, 0.001953125
  %v855 = vmul.f32 %v656, %v656
  %v856 = vsub.f32 %v854, %v855
  %v857 = vld [vmem:[%s2] sm:$0x1]
  %v858 = vadd.f32 %v856, 1e-05
  %v859 = vrsqrt.pop %v858
  %v860 = vmul.f32 %v859, %v858
  %v861 = vmul.f32 %v860, %v859
  %v862 = vmul.f32 0.5, %v861
  %v863 = vsub.f32 1.5, %v862
  %v864 = vmul.f32 %v859, %v863
  %vm865 = vweird.f32 %v858
  %vm866 = vweird.f32 %v859
  %vm867 = vmor %vm865, %vm866
  %v868 = vsel %vm867, %v859, %v864
  %v869 = vmul.f32 %v857, %v868
  %v870 = vld [vmem:[%s3] sm:$0x1]
  %v871 = vmul.f32 %v656, %v869
  %v872 = vsub.f32 %v870, %v871
  %v874 = vperm.slane %v869, 0
  %v876 = vmul.f32 %v363, %v874
  %v877 = vmul.f32 %v365, %v874
  %v878 = vmul.f32 %v368, %v874
  %v879 = vmul.f32 %v370, %v874
  %v880 = vmul.f32 %v373, %v874
  %v881 = vmul.f32 %v375, %v874
  %v882 = vmul.f32 %v378, %v874
  %v883 = vmul.f32 %v380, %v874
  %v884 = vmul.f32 %v383, %v874
  %v885 = vmul.f32 %v385, %v874
  %v886 = vmul.f32 %v388, %v874
  %v887 = vmul.f32 %v390, %v874
  %v888 = vmul.f32 %v393, %v874
  %v889 = vmul.f32 %v395, %v874
  %v890 = vmul.f32 %v398, %v874
  %v891 = vmul.f32 %v400, %v874
  %v892 = vmul.f32 %v403, %v874
  %v893 = vmul.f32 %v405, %v874
  %v894 = vmul.f32 %v408, %v874
  %v895 = vmul.f32 %v410, %v874
  %v896 = vmul.f32 %v413, %v874
  %v897 = vmul.f32 %v415, %v874
  %v898 = vmul.f32 %v418, %v874
  %v899 = vmul.f32 %v420, %v874
  %v900 = vmul.f32 %v423, %v874
  %v901 = vmul.f32 %v425, %v874
  %v902 = vmul.f32 %v428, %v874
  %v903 = vmul.f32 %v430, %v874
  %v904 = vmul.f32 %v433, %v874
  %v905 = vmul.f32 %v435, %v874
  %v906 = vmul.f32 %v438, %v874
  %v907 = vmul.f32 %v440, %v874
  %v908 = vmul.f32 %v443, %v874
  %v909 = vmul.f32 %v445, %v874
  %v910 = vmul.f32 %v448, %v874
  %v911 = vmul.f32 %v450, %v874
  %v912 = vmul.f32 %v453, %v874
  %v913 = vmul.f32 %v455, %v874
  %v914 = vmul.f32 %v458, %v874
  %v915 = vmul.f32 %v460, %v874
  %v916 = vmul.f32 %v463, %v874
  %v917 = vmul.f32 %v465, %v874
  %v918 = vmul.f32 %v468, %v874
  %v919 = vmul.f32 %v470, %v874
  %v920 = vmul.f32 %v473, %v874
  %v921 = vmul.f32 %v475, %v874
  %v922 = vmul.f32 %v478, %v874
  %v923 = vmul.f32 %v480, %v874
  %v924 = vmul.f32 %v483, %v874
  %v925 = vmul.f32 %v485, %v874
  %v926 = vmul.f32 %v488, %v874
  %v927 = vmul.f32 %v490, %v874
  %v928 = vmul.f32 %v493, %v874
  %v929 = vmul.f32 %v495, %v874
  %v930 = vmul.f32 %v498, %v874
  %v931 = vmul.f32 %v500, %v874
  %v932 = vmul.f32 %v503, %v874
  %v933 = vmul.f32 %v505, %v874
  %v934 = vmul.f32 %v508, %v874
  %v935 = vmul.f32 %v510, %v874
  %v936 = vmul.f32 %v513, %v874
  %v937 = vmul.f32 %v515, %v874
  %v938 = vmul.f32 %v518, %v874
  %v939 = vmul.f32 %v520, %v874
  %v941 = vperm.slane %v872, 0
  %v943 = vadd.f32 %v876, %v941
  %v944 = vadd.f32 %v877, %v941
  %v945 = vadd.f32 %v878, %v941
  %v946 = vadd.f32 %v879, %v941
  %v947 = vadd.f32 %v880, %v941
  %v948 = vadd.f32 %v881, %v941
  %v949 = vadd.f32 %v882, %v941
  %v950 = vadd.f32 %v883, %v941
  %v951 = vadd.f32 %v884, %v941
  %v952 = vadd.f32 %v885, %v941
  %v953 = vadd.f32 %v886, %v941
  %v954 = vadd.f32 %v887, %v941
  %v955 = vadd.f32 %v888, %v941
  %v956 = vadd.f32 %v889, %v941
  %v957 = vadd.f32 %v890, %v941
  %v958 = vadd.f32 %v891, %v941
  %v959 = vadd.f32 %v892, %v941
  %v960 = vadd.f32 %v893, %v941
  %v961 = vadd.f32 %v894, %v941
  %v962 = vadd.f32 %v895, %v941
  %v963 = vadd.f32 %v896, %v941
  %v964 = vadd.f32 %v897, %v941
  %v965 = vadd.f32 %v898, %v941
  %v966 = vadd.f32 %v899, %v941
  %v967 = vadd.f32 %v900, %v941
  %v968 = vadd.f32 %v901, %v941
  %v969 = vadd.f32 %v902, %v941
  %v970 = vadd.f32 %v903, %v941
  %v971 = vadd.f32 %v904, %v941
  %v972 = vadd.f32 %v905, %v941
  %v973 = vadd.f32 %v906, %v941
  %v974 = vadd.f32 %v907, %v941
  %v975 = vadd.f32 %v908, %v941
  %v976 = vadd.f32 %v909, %v941
  %v977 = vadd.f32 %v910, %v941
  %v978 = vadd.f32 %v911, %v941
  %v979 = vadd.f32 %v912, %v941
  %v980 = vadd.f32 %v913, %v941
  %v981 = vadd.f32 %v914, %v941
  %v982 = vadd.f32 %v915, %v941
  %v983 = vadd.f32 %v916, %v941
  %v984 = vadd.f32 %v917, %v941
  %v985 = vadd.f32 %v918, %v941
  %v986 = vadd.f32 %v919, %v941
  %v987 = vadd.f32 %v920, %v941
  %v988 = vadd.f32 %v921, %v941
  %v989 = vadd.f32 %v922, %v941
  %v990 = vadd.f32 %v923, %v941
  %v991 = vadd.f32 %v924, %v941
  %v992 = vadd.f32 %v925, %v941
  %v993 = vadd.f32 %v926, %v941
  %v994 = vadd.f32 %v927, %v941
  %v995 = vadd.f32 %v928, %v941
  %v996 = vadd.f32 %v929, %v941
  %v997 = vadd.f32 %v930, %v941
  %v998 = vadd.f32 %v931, %v941
  %v999 = vadd.f32 %v932, %v941
  %v1000 = vadd.f32 %v933, %v941
  %v1001 = vadd.f32 %v934, %v941
  %v1002 = vadd.f32 %v935, %v941
  %v1003 = vadd.f32 %v936, %v941
  %v1004 = vadd.f32 %v937, %v941
  %v1005 = vadd.f32 %v938, %v941
  %v1006 = vadd.f32 %v939, %v941
  %v1007 = vmax.f32 %v943, -1.0
  %v1008 = vmax.f32 %v944, -1.0
  %v1009 = vmax.f32 %v945, -1.0
  %v1010 = vmax.f32 %v946, -1.0
  %v1011 = vmax.f32 %v947, -1.0
  %v1012 = vmax.f32 %v948, -1.0
  %v1013 = vmax.f32 %v949, -1.0
  %v1014 = vmax.f32 %v950, -1.0
  %v1015 = vmax.f32 %v951, -1.0
  %v1016 = vmax.f32 %v952, -1.0
  %v1017 = vmax.f32 %v953, -1.0
  %v1018 = vmax.f32 %v954, -1.0
  %v1019 = vmax.f32 %v955, -1.0
  %v1020 = vmax.f32 %v956, -1.0
  %v1021 = vmax.f32 %v957, -1.0
  %v1022 = vmax.f32 %v958, -1.0
  %v1023 = vmax.f32 %v959, -1.0
  %v1024 = vmax.f32 %v960, -1.0
  %v1025 = vmax.f32 %v961, -1.0
  %v1026 = vmax.f32 %v962, -1.0
  %v1027 = vmax.f32 %v963, -1.0
  %v1028 = vmax.f32 %v964, -1.0
  %v1029 = vmax.f32 %v965, -1.0
  %v1030 = vmax.f32 %v966, -1.0
  %v1031 = vmax.f32 %v967, -1.0
  %v1032 = vmax.f32 %v968, -1.0
  %v1033 = vmax.f32 %v969, -1.0
  %v1034 = vmax.f32 %v970, -1.0
  %v1035 = vmax.f32 %v971, -1.0
  %v1036 = vmax.f32 %v972, -1.0
  %v1037 = vmax.f32 %v973, -1.0
  %v1038 = vmax.f32 %v974, -1.0
  %v1039 = vmax.f32 %v975, -1.0
  %v1040 = vmax.f32 %v976, -1.0
  %v1041 = vmax.f32 %v977, -1.0
  %v1042 = vmax.f32 %v978, -1.0
  %v1043 = vmax.f32 %v979, -1.0
  %v1044 = vmax.f32 %v980, -1.0
  %v1045 = vmax.f32 %v981, -1.0
  %v1046 = vmax.f32 %v982, -1.0
  %v1047 = vmax.f32 %v983, -1.0
  %v1048 = vmax.f32 %v984, -1.0
  %v1049 = vmax.f32 %v985, -1.0
  %v1050 = vmax.f32 %v986, -1.0
  %v1051 = vmax.f32 %v987, -1.0
  %v1052 = vmax.f32 %v988, -1.0
  %v1053 = vmax.f32 %v989, -1.0
  %v1054 = vmax.f32 %v990, -1.0
  %v1055 = vmax.f32 %v991, -1.0
  %v1056 = vmax.f32 %v992, -1.0
  %v1057 = vmax.f32 %v993, -1.0
  %v1058 = vmax.f32 %v994, -1.0
  %v1059 = vmax.f32 %v995, -1.0
  %v1060 = vmax.f32 %v996, -1.0
  %v1061 = vmax.f32 %v997, -1.0
  %v1062 = vmax.f32 %v998, -1.0
  %v1063 = vmax.f32 %v999, -1.0
  %v1064 = vmax.f32 %v1000, -1.0
  %v1065 = vmax.f32 %v1001, -1.0
  %v1066 = vmax.f32 %v1002, -1.0
  %v1067 = vmax.f32 %v1003, -1.0
  %v1068 = vmax.f32 %v1004, -1.0
  %v1069 = vmax.f32 %v1005, -1.0
  %v1070 = vmax.f32 %v1006, -1.0
  %v1071 = vmin.f32 %v1007, 1.0
  %v1072 = vmin.f32 %v1008, 1.0
  %v1073 = vmin.f32 %v1009, 1.0
  %v1074 = vmin.f32 %v1010, 1.0
  %v1075 = vmin.f32 %v1011, 1.0
  %v1076 = vmin.f32 %v1012, 1.0
  %v1077 = vmin.f32 %v1013, 1.0
  %v1078 = vmin.f32 %v1014, 1.0
  %v1079 = vmin.f32 %v1015, 1.0
  %v1080 = vmin.f32 %v1016, 1.0
  %v1081 = vmin.f32 %v1017, 1.0
  %v1082 = vmin.f32 %v1018, 1.0
  %v1083 = vmin.f32 %v1019, 1.0
  %v1084 = vmin.f32 %v1020, 1.0
  %v1085 = vmin.f32 %v1021, 1.0
  %v1086 = vmin.f32 %v1022, 1.0
  %v1087 = vmin.f32 %v1023, 1.0
  %v1088 = vmin.f32 %v1024, 1.0
  %v1089 = vmin.f32 %v1025, 1.0
  %v1090 = vmin.f32 %v1026, 1.0
  %v1091 = vmin.f32 %v1027, 1.0
  %v1092 = vmin.f32 %v1028, 1.0
  %v1093 = vmin.f32 %v1029, 1.0
  %v1094 = vmin.f32 %v1030, 1.0
  %v1095 = vmin.f32 %v1031, 1.0
  %v1096 = vmin.f32 %v1032, 1.0
  %v1097 = vmin.f32 %v1033, 1.0
  %v1098 = vmin.f32 %v1034, 1.0
  %v1099 = vmin.f32 %v1035, 1.0
  %v1100 = vmin.f32 %v1036, 1.0
  %v1101 = vmin.f32 %v1037, 1.0
  %v1102 = vmin.f32 %v1038, 1.0
  %v1103 = vmin.f32 %v1039, 1.0
  %v1104 = vmin.f32 %v1040, 1.0
  %v1105 = vmin.f32 %v1041, 1.0
  %v1106 = vmin.f32 %v1042, 1.0
  %v1107 = vmin.f32 %v1043, 1.0
  %v1108 = vmin.f32 %v1044, 1.0
  %v1109 = vmin.f32 %v1045, 1.0
  %v1110 = vmin.f32 %v1046, 1.0
  %v1111 = vmin.f32 %v1047, 1.0
  %v1112 = vmin.f32 %v1048, 1.0
  %v1113 = vmin.f32 %v1049, 1.0
  %v1114 = vmin.f32 %v1050, 1.0
  %v1115 = vmin.f32 %v1051, 1.0
  %v1116 = vmin.f32 %v1052, 1.0
  %v1117 = vmin.f32 %v1053, 1.0
  %v1118 = vmin.f32 %v1054, 1.0
  %v1119 = vmin.f32 %v1055, 1.0
  %v1120 = vmin.f32 %v1056, 1.0
  %v1121 = vmin.f32 %v1057, 1.0
  %v1122 = vmin.f32 %v1058, 1.0
  %v1123 = vmin.f32 %v1059, 1.0
  %v1124 = vmin.f32 %v1060, 1.0
  %v1125 = vmin.f32 %v1061, 1.0
  %v1126 = vmin.f32 %v1062, 1.0
  %v1127 = vmin.f32 %v1063, 1.0
  %v1128 = vmin.f32 %v1064, 1.0
  %v1129 = vmin.f32 %v1065, 1.0
  %v1130 = vmin.f32 %v1066, 1.0
  %v1131 = vmin.f32 %v1067, 1.0
  %v1132 = vmin.f32 %v1068, 1.0
  %v1133 = vmin.f32 %v1069, 1.0
  %v1134 = vmin.f32 %v1070, 1.0
  %v1135 = vadd.f32 %v1071, %v1087
  %v1136 = vadd.f32 %v1072, %v1088
  %v1137 = vadd.f32 %v1073, %v1089
  %v1138 = vadd.f32 %v1074, %v1090
  %v1139 = vadd.f32 %v1075, %v1091
  %v1140 = vadd.f32 %v1076, %v1092
  %v1141 = vadd.f32 %v1077, %v1093
  %v1142 = vadd.f32 %v1078, %v1094
  %v1143 = vadd.f32 %v1079, %v1095
  %v1144 = vadd.f32 %v1080, %v1096
  %v1145 = vadd.f32 %v1081, %v1097
  %v1146 = vadd.f32 %v1082, %v1098
  %v1147 = vadd.f32 %v1083, %v1099
  %v1148 = vadd.f32 %v1084, %v1100
  %v1149 = vadd.f32 %v1085, %v1101
  %v1150 = vadd.f32 %v1086, %v1102
  %v1151 = vadd.f32 %v1135, %v1103
  %v1152 = vadd.f32 %v1136, %v1104
  %v1153 = vadd.f32 %v1137, %v1105
  %v1154 = vadd.f32 %v1138, %v1106
  %v1155 = vadd.f32 %v1139, %v1107
  %v1156 = vadd.f32 %v1140, %v1108
  %v1157 = vadd.f32 %v1141, %v1109
  %v1158 = vadd.f32 %v1142, %v1110
  %v1159 = vadd.f32 %v1143, %v1111
  %v1160 = vadd.f32 %v1144, %v1112
  %v1161 = vadd.f32 %v1145, %v1113
  %v1162 = vadd.f32 %v1146, %v1114
  %v1163 = vadd.f32 %v1147, %v1115
  %v1164 = vadd.f32 %v1148, %v1116
  %v1165 = vadd.f32 %v1149, %v1117
  %v1166 = vadd.f32 %v1150, %v1118
  %v1167 = vadd.f32 %v1151, %v1119
  %v1168 = vadd.f32 %v1152, %v1120
  %v1169 = vadd.f32 %v1153, %v1121
  %v1170 = vadd.f32 %v1154, %v1122
  %v1171 = vadd.f32 %v1155, %v1123
  %v1172 = vadd.f32 %v1156, %v1124
  %v1173 = vadd.f32 %v1157, %v1125
  %v1174 = vadd.f32 %v1158, %v1126
  %v1175 = vadd.f32 %v1159, %v1127
  %v1176 = vadd.f32 %v1160, %v1128
  %v1177 = vadd.f32 %v1161, %v1129
  %v1178 = vadd.f32 %v1162, %v1130
  %v1179 = vadd.f32 %v1163, %v1131
  %v1180 = vadd.f32 %v1164, %v1132
  %v1181 = vadd.f32 %v1165, %v1133
  %v1182 = vadd.f32 %v1166, %v1134
  %v1183 = vmul.f32 %v1167, 0.25
  %v1184 = vmul.f32 %v1168, 0.25
  %v1185 = vmul.f32 %v1169, 0.25
  %v1186 = vmul.f32 %v1170, 0.25
  %v1187 = vmul.f32 %v1171, 0.25
  %v1188 = vmul.f32 %v1172, 0.25
  %v1189 = vmul.f32 %v1173, 0.25
  %v1190 = vmul.f32 %v1174, 0.25
  %v1191 = vmul.f32 %v1175, 0.25
  %v1192 = vmul.f32 %v1176, 0.25
  %v1193 = vmul.f32 %v1177, 0.25
  %v1194 = vmul.f32 %v1178, 0.25
  %v1195 = vmul.f32 %v1179, 0.25
  %v1196 = vmul.f32 %v1180, 0.25
  %v1197 = vmul.f32 %v1181, 0.25
  %v1198 = vmul.f32 %v1182, 0.25
  %1199 = vst.msk [vmem:[%s4] sm:$0xff] %vm522, %v1183
  %1200 = vst.msk [vmem:[%s4 + $0x8] sm:$0xff] %vm522, %v1184
  %1201 = vst.msk [vmem:[%s4 + $0x10] sm:$0xff] %vm522, %v1185
  %1202 = vst.msk [vmem:[%s4 + $0x18] sm:$0xff] %vm522, %v1186
  %1203 = vst.msk [vmem:[%s4 + $0x20] sm:$0xff] %vm522, %v1187
  %1204 = vst.msk [vmem:[%s4 + $0x28] sm:$0xff] %vm522, %v1188
  %1205 = vst.msk [vmem:[%s4 + $0x30] sm:$0xff] %vm522, %v1189
  %1206 = vst.msk [vmem:[%s4 + $0x38] sm:$0xff] %vm522, %v1190
  %1207 = vst.msk [vmem:[%s4 + $0x40] sm:$0xff] %vm522, %v1191
  %1208 = vst.msk [vmem:[%s4 + $0x48] sm:$0xff] %vm522, %v1192
  %1209 = vst.msk [vmem:[%s4 + $0x50] sm:$0xff] %vm522, %v1193
  %1210 = vst.msk [vmem:[%s4 + $0x58] sm:$0xff] %vm522, %v1194
  %1211 = vst.msk [vmem:[%s4 + $0x60] sm:$0xff] %vm522, %v1195
  %1212 = vst.msk [vmem:[%s4 + $0x68] sm:$0xff] %vm522, %v1196
  %1213 = vst.msk [vmem:[%s4 + $0x70] sm:$0xff] %vm522, %v1197
  %1214 = vst.msk [vmem:[%s4 + $0x78] sm:$0xff] %vm522, %v1198
  // Predicated region
  $region18: #{net_forward.2} parent=0 // pred_check
    _
  $region19: #{net_forward.2} parent=0 // pred_check_branch
    %1216 = sbr.rel (0) target = $region21
  $region20: #{net_forward.2} parent=0 // pred_region
    _
  $region21: #{net_forward.2} parent=0 // pred_fallthru
    _
  // Predicated region
  $region22: #{net_forward.2} parent=0 // pred_check
    _
  $region23: #{net_forward.2} parent=0 // pred_check_branch
    %1218 = sbr.rel (0) target = $region25
  $region24: #{net_forward.2} parent=0 // pred_region
    _
  $region25: #{net_forward.2} parent=0 // pred_fallthru
    _

// kernel: net_forward.3
$region0: #{net_forward.3}
  #allocation0 [shape = 'u32[]', space=smem, size = 0x4, offset = 0x4, fixed_abs, tag = 'smem constant byte address 0x4 - core index']
  #allocation1 [shape = 'u32[72,128]{1,0:T(1,128)}', space=vmem, size = 0x9000, scoped, tag = 'internal scratch']
  #allocation2 [shape = 'bf16[32,25]{1,0:T(8,128)(2,1)}', space=vmem, size = 0x2000, scoped, tag = 'scratch operand']
  %s0 = inlined_call_operand.vmem [shape: bf16[128,27], index: 0, kind: input, shape index: {}]
  %s1 = inlined_call_operand.vmem [shape: bf16[27,25], index: 1, kind: input, shape index: {}]
  %s2 = inlined_call_operand.vmem [shape: f32[1,25], index: 2, kind: input, shape index: {}]
  %s3 = inlined_call_operand.vmem [shape: f32[1,25], index: 3, kind: input, shape index: {}]
  %s4 = inlined_call_operand.vmem [shape: bf16[16,25,150], index: 4, kind: input, shape index: {}]
  %s5 = inlined_call_operand.vmem [shape: f32[1,150], index: 5, kind: input, shape index: {}]
  %s6 = inlined_call_operand.vmem [shape: f32[1,150], index: 6, kind: input, shape index: {}]
  %s7 = inlined_call_operand.vmem [shape: bf16[150,10], index: 7, kind: input, shape index: {}]
  %s8 = inlined_call_operand.vmem [shape: f32[1,10], index: 8, kind: input, shape index: {}]
  %s9 = inlined_call_operand.vmem [shape: f32[1,10], index: 9, kind: input, shape index: {}]
  %s10 = inlined_call_operand.hbm [shape: f32[2,10], index: 10, kind: output, shape index: {}]
  %s11 = sld [smem:[#allocation0]]
  $region50: #{net_forward.3} parent=0
    _
  %s13 = ssub.s32 1, %s11
  %s14 = scalar_select 0, %s13, %s11
  $region1: #{net_forward.3} parent=0
    #allocation3 [shape = 'u8[1024]{0}', space=vmem, size = 0x400, scoped, tag = 'output window, operand 0, single buffered']
    #allocation4 [shape = 's32[1]{0}', space=sflag, size = 0x4, scoped, tag = 'scoped memory for net_forward.3']
    %15 = vsyncpa [#allocation4], 0
    // Predicated region
    $region2: #{net_forward.3} parent=1 // pred_check
      _
    $region3: #{net_forward.3} parent=1 // pred_check_branch
      %17 = sbr.rel (0) target = $region5
    $region4: #{net_forward.3} parent=1 // pred_region
      _
    $region5: #{net_forward.3} parent=1 // pred_fallthru
      _
    // Predicated region
    $region6: #{net_forward.3} parent=1 // pred_check
      _
    $region7: #{net_forward.3} parent=1 // pred_check_branch
      %19 = sbr.rel (0) target = $region9
    $region8: #{net_forward.3} parent=1 // pred_region
      _
    $region9: #{net_forward.3} parent=1 // pred_fallthru
      _
    // Predicated region
    $region10: #{net_forward.3} parent=1 // pred_check
      _
    $region11: #{net_forward.3} parent=1 // pred_check_branch
      %21 = sbr.rel (0) target = $region13
    $region12: #{net_forward.3} parent=1 // pred_region
      _
    $region13: #{net_forward.3} parent=1 // pred_fallthru
      _
    // Predicated region
    $region14: #{net_forward.3} parent=1 // pred_check
      _
    $region15: #{net_forward.3} parent=1 // pred_check_branch
      %23 = sbr.rel (0) target = $region17
    $region16: #{net_forward.3} parent=1 // pred_region
      _
    $region17: #{net_forward.3} parent=1 // pred_fallthru
      _
    // Predicated region
    $region18: #{net_forward.3} parent=1 // pred_check
      _
    $region19: #{net_forward.3} parent=1 // pred_check_branch
      %25 = sbr.rel (0) target = $region21
    $region20: #{net_forward.3} parent=1 // pred_region
      _
    $region21: #{net_forward.3} parent=1 // pred_fallthru
      _
    // Predicated region
    $region22: #{net_forward.3} parent=1 // pred_check
      _
    $region23: #{net_forward.3} parent=1 // pred_check_branch
      %27 = sbr.rel (0) target = $region25
    $region24: #{net_forward.3} parent=1 // pred_region
      _
    $region25: #{net_forward.3} parent=1 // pred_fallthru
      _
    // Predicated region
    $region26: #{net_forward.3} parent=1 // pred_check
      _
    $region27: #{net_forward.3} parent=1 // pred_check_branch
      %29 = sbr.rel (0) target = $region29
    $region28: #{net_forward.3} parent=1 // pred_region
      _
    $region29: #{net_forward.3} parent=1 // pred_fallthru
      _
    // Predicated region
    $region30: #{net_forward.3} parent=1 // pred_check
      _
    $region31: #{net_forward.3} parent=1 // pred_check_branch
      %31 = sbr.rel (0) target = $region33
    $region32: #{net_forward.3} parent=1 // pred_region
      _
    $region33: #{net_forward.3} parent=1 // pred_fallthru
      _
    // Predicated region
    $region34: #{net_forward.3} parent=1 // pred_check
      _
    $region35: #{net_forward.3} parent=1 // pred_check_branch
      %33 = sbr.rel (0) target = $region37
    $region36: #{net_forward.3} parent=1 // pred_region
      _
    $region37: #{net_forward.3} parent=1 // pred_fallthru
      _
    // Predicated region
    $region38: #{net_forward.3} parent=1 // pred_check
      _
    $region39: #{net_forward.3} parent=1 // pred_check_branch
      %35 = sbr.rel (0) target = $region41
    $region40: #{net_forward.3} parent=1 // pred_region
      _
    $region41: #{net_forward.3} parent=1 // pred_fallthru
      _
    %v37 = vld [vmem:[%s0] sm:$0xf]
    %v38 = vld [vmem:[%s0 + $0x4] sm:$0xf]
    %v39 = vld [vmem:[%s0 + $0x8] sm:$0xf]
    %v40 = vld [vmem:[%s0 + $0xc] sm:$0xf]
    %v41 = vld [vmem:[%s0 + $0x10] sm:$0xf]
    %v42 = vld [vmem:[%s0 + $0x14] sm:$0xf]
    %v43 = vld [vmem:[%s0 + $0x18] sm:$0xf]
    %v44 = vld [vmem:[%s0 + $0x1c] sm:$0xf]
    %v45 = vld [vmem:[%s0 + $0x20] sm:$0xf]
    %v46 = vld [vmem:[%s0 + $0x24] sm:$0xf]
    %v47 = vld [vmem:[%s0 + $0x28] sm:$0xf]
    %v48 = vld [vmem:[%s0 + $0x2c] sm:$0xf]
    %v49 = vld [vmem:[%s0 + $0x30] sm:$0xf]
    %v50 = vld [vmem:[%s0 + $0x34] sm:$0xf]
    %v51 = vld [vmem:[%s0 + $0x38] sm:$0xf]
    %v52 = vld [vmem:[%s0 + $0x3c] sm:$0xf]
    %v53 = vld [vmem:[%s1] sm:$0xf]
    %v54 = vld [vmem:[%s1 + $0x4] sm:$0xf]
    %v55 = vld [vmem:[%s1 + $0x8] sm:$0xf]
    %v56 = vld [vmem:[%s1 + $0xc] sm:$0x3]
    %v73 = vunpack.c.l.b16 %v37
    %v74 = vunpack.c.l.b16 %v38
    %v75 = vunpack.c.l.b16 %v39
    %v76 = vunpack.c.l.b16 %v40
    %v77 = vunpack.c.l.b16 %v41
    %v78 = vunpack.c.l.b16 %v42
    %v79 = vunpack.c.l.b16 %v43
    %v80 = vunpack.c.l.b16 %v44
    %v81 = vunpack.c.l.b16 %v45
    %v82 = vunpack.c.l.b16 %v46
    %v83 = vunpack.c.l.b16 %v47
    %v84 = vunpack.c.l.b16 %v48
    %v85 = vunpack.c.l.b16 %v49
    %v86 = vunpack.c.l.b16 %v50
    %v87 = vunpack.c.l.b16 %v51
    %v88 = vunpack.c.l.b16 %v52
    %v89 = vpack.c.b16 %v74, %v73
    %v90 = vpack.c.b16 %v76, %v75
    %v91 = vpack.c.b16 %v78, %v77
    %v92 = vpack.c.b16 %v80, %v79
    %v93 = vpack.c.b16 %v82, %v81
    %v94 = vpack.c.b16 %v84, %v83
    %v95 = vpack.c.b16 %v86, %v85
    %v96 = vpack.c.b16 %v88, %v87
    %v101 = vunpack.c.l.b16 %v53
    %v102 = vunpack.c.l.b16 %v54
    %v103 = vunpack.c.l.b16 %v55
    %v104 = vunpack.c.l.b16 %v56
    %v105 = vpack.c.b16 %v102, %v101
    %v106 = vpack.c.b16 %v104, %v103
    %vm108 = vcmask 220160
    %v110 = vsel %vm108, %v89, 0
    %v113 = vsel %vm108, %v90, 0
    %v116 = vsel %vm108, %v91, 0
    %v119 = vsel %vm108, %v92, 0
    %v122 = vsel %vm108, %v93, 0
    %v125 = vsel %vm108, %v94, 0
    %v128 = vsel %vm108, %v95, 0
    %v131 = vsel %vm108, %v96, 0
    %vm133 = vcmask 1044480
    %vm134 = vcmask 1045504
    %v135 = vsel %vm133, 4294967295, 65535
    %v136 = vsel %vm134, %v135, 0
    %v138 = vand.u32 %v106, %v136
    %140 = vmatpush.bf16.msra.mxu0 0
    %141 = vmatpush.bf16.msra.mxu0 0
    %142 = vmatpush.bf16.msra.mxu0 0
    %143 = vmatpush.bf16.msra.mxu0 0
    %144 = vmatpush.bf16.msra.mxu0 0
    %145 = vmatpush.bf16.msra.mxu0 0
    %146 = vmatpush.bf16.msra.mxu0 %v138
    %147 = vmatpush.bf16.msra.mxu0 %v105
    %148 = vmatmul.bf16.gmra.mxu0 %v110
    %v149 = vpop.f32.mrf.mxu0
    %v150 = vadd.f32 0.0, %v149
    %v151 = vpop.f32.mrf.mxu0
    %v152 = vadd.f32 0.0, %v151
    %153 = vmatmul.bf16.gmra.mxu0 %v113
    %v154 = vpop.f32.mrf.mxu0
    %v155 = vadd.f32 0.0, %v154
    %v156 = vpop.f32.mrf.mxu0
    %v157 = vadd.f32 0.0, %v156
    %158 = vmatmul.bf16.gmra.mxu0 %v116
    %v159 = vpop.f32.mrf.mxu0
    %v160 = vadd.f32 0.0, %v159
    %v161 = vpop.f32.mrf.mxu0
    %v162 = vadd.f32 0.0, %v161
    %163 = vmatmul.bf16.gmra.mxu0 %v119
    %v164 = vpop.f32.mrf.mxu0
    %v165 = vadd.f32 0.0, %v164
    %v166 = vpop.f32.mrf.mxu0
    %v167 = vadd.f32 0.0, %v166
    %168 = vmatmul.bf16.gmra.mxu0 %v122
    %v169 = vpop.f32.mrf.mxu0
    %v170 = vadd.f32 0.0, %v169
    %v171 = vpop.f32.mrf.mxu0
    %v172 = vadd.f32 0.0, %v171
    %173 = vmatmul.bf16.gmra.mxu0 %v125
    %v174 = vpop.f32.mrf.mxu0
    %v175 = vadd.f32 0.0, %v174
    %v176 = vpop.f32.mrf.mxu0
    %v177 = vadd.f32 0.0, %v176
    %178 = vmatmul.bf16.gmra.mxu0 %v128
    %v179 = vpop.f32.mrf.mxu0
    %v180 = vadd.f32 0.0, %v179
    %v181 = vpop.f32.mrf.mxu0
    %v182 = vadd.f32 0.0, %v181
    %183 = vmatmul.bf16.gmra.mxu0 %v131
    %v184 = vpop.f32.mrf.mxu0
    %v185 = vadd.f32 0.0, %v184
    %v186 = vpop.f32.mrf.mxu0
    %v187 = vadd.f32 0.0, %v186
    %188 = vdwg.mxu0
    %vm189 = vcmask 203776
    %v190 = vsel %vm189, %v150, 0.0
    %v191 = vsel %vm189, %v152, 0.0
    %v192 = vadd.f32 %v190, %v191
    %v193 = vsel %vm189, %v155, 0.0
    %v194 = vadd.f32 %v192, %v193
    %v195 = vsel %vm189, %v157, 0.0
    %v196 = vadd.f32 %v194, %v195
    %v197 = vsel %vm189, %v160, 0.0
    %v198 = vadd.f32 %v196, %v197
    %v199 = vsel %vm189, %v162, 0.0
    %v200 = vadd.f32 %v198, %v199
    %v201 = vsel %vm189, %v165, 0.0
    %v202 = vadd.f32 %v200, %v201
    %v203 = vsel %vm189, %v167, 0.0
    %v204 = vadd.f32 %v202, %v203
    %v205 = vsel %vm189, %v170, 0.0
    %v206 = vadd.f32 %v204, %v205
    %v207 = vsel %vm189, %v172, 0.0
    %v208 = vadd.f32 %v206, %v207
    %v209 = vsel %vm189, %v175, 0.0
    %v210 = vadd.f32 %v208, %v209
    %v211 = vsel %vm189, %v177, 0.0
    %v212 = vadd.f32 %v210, %v211
    %v213 = vsel %vm189, %v180, 0.0
    %v214 = vadd.f32 %v212, %v213
    %v215 = vsel %vm189, %v182, 0.0
    %v216 = vadd.f32 %v214, %v215
    %v217 = vsel %vm189, %v185, 0.0
    %v218 = vadd.f32 %v216, %v217
    %v219 = vsel %vm189, %v187, 0.0
    %v220 = vadd.f32 %v218, %v219
    %v221 = vrot.slane %v220, 4
    %v222 = vadd.f32 %v220, %v221
    %v223 = vrot.slane %v222, 2
    %v224 = vadd.f32 %v222, %v223
    %v225 = vrot.slane %v224, 1
    %v226 = vadd.f32 %v224, %v225
    %v227 = vmul.f32 %v226, 0.0078125
    %v228 = vmul.f32 %v150, %v150
    %v229 = vmul.f32 %v152, %v152
    %v230 = vmul.f32 %v155, %v155
    %v231 = vmul.f32 %v157, %v157
    %v232 = vmul.f32 %v160, %v160
    %v233 = vmul.f32 %v162, %v162
    %v234 = vmul.f32 %v165, %v165
    %v235 = vmul.f32 %v167, %v167
    %v236 = vmul.f32 %v170, %v170
    %v237 = vmul.f32 %v172, %v172
    %v238 = vmul.f32 %v175, %v175
    %v239 = vmul.f32 %v177, %v177
    %v240 = vmul.f32 %v180, %v180
    %v241 = vmul.f32 %v182, %v182
    %v242 = vmul.f32 %v185, %v185
    %v243 = vmul.f32 %v187, %v187
    %v244 = vsel %vm189, %v228, 0.0
    %v245 = vsel %vm189, %v229, 0.0
    %v246 = vadd.f32 %v244, %v245
    %v247 = vsel %vm189, %v230, 0.0
    %v248 = vadd.f32 %v246, %v247
    %v249 = vsel %vm189, %v231, 0.0
    %v250 = vadd.f32 %v248, %v249
    %v251 = vsel %vm189, %v232, 0.0
    %v252 = vadd.f32 %v250, %v251
    %v253 = vsel %vm189, %v233, 0.0
    %v254 = vadd.f32 %v252, %v253
    %v255 = vsel %vm189, %v234, 0.0
    %v256 = vadd.f32 %v254, %v255
    %v257 = vsel %vm189, %v235, 0.0
    %v258 = vadd.f32 %v256, %v257
    %v259 = vsel %vm189, %v236, 0.0
    %v260 = vadd.f32 %v258, %v259
    %v261 = vsel %vm189, %v237, 0.0
    %v262 = vadd.f32 %v260, %v261
    %v263 = vsel %vm189, %v238, 0.0
    %v264 = vadd.f32 %v262, %v263
    %v265 = vsel %vm189, %v239, 0.0
    %v266 = vadd.f32 %v264, %v265
    %v267 = vsel %vm189, %v240, 0.0
    %v268 = vadd.f32 %v266, %v267
    %v269 = vsel %vm189, %v241, 0.0
    %v270 = vadd.f32 %v268, %v269
    %v271 = vsel %vm189, %v242, 0.0
    %v272 = vadd.f32 %v270, %v271
    %v273 = vsel %vm189, %v243, 0.0
    %v274 = vadd.f32 %v272, %v273
    %v275 = vrot.slane %v274, 4
    %v276 = vadd.f32 %v274, %v275
    %v277 = vrot.slane %v276, 2
    %v278 = vadd.f32 %v276, %v277
    %v279 = vrot.slane %v278, 1
    %v280 = vadd.f32 %v278, %v279
    %v281 = vmul.f32 %v280, 0.0078125
    %v282 = vmul.f32 %v227, %v227
    %v283 = vsub.f32 %v281, %v282
    %v284 = vld [vmem:[%s2] sm:$0x1]
    %v285 = vadd.f32 %v283, 1e-05
    %v286 = vrsqrt.pop %v285
    %v287 = vmul.f32 %v286, %v285
    %v288 = vmul.f32 %v287, %v286
    %v289 = vmul.f32 0.5, %v288
    %v290 = vsub.f32 1.5, %v289
    %v291 = vmul.f32 %v286, %v290
    %vm292 = vweird.f32 %v285
    %vm293 = vweird.f32 %v286
    %vm294 = vmor %vm292, %vm293
    %v295 = vsel %vm294, %v286, %v291
    %v296 = vmul.f32 %v284, %v295
    %v297 = vld [vmem:[%s3] sm:$0x1]
    %v298 = vmul.f32 %v227, %v296
    %v299 = vsub.f32 %v297, %v298
    %v301 = vperm.slane %v296, 0
    %v303 = vmul.f32 %v150, %v301
    %v304 = vmul.f32 %v152, %v301
    %v305 = vmul.f32 %v155, %v301
    %v306 = vmul.f32 %v157, %v301
    %v307 = vmul.f32 %v160, %v301
    %v308 = vmul.f32 %v162, %v301
    %v309 = vmul.f32 %v165, %v301
    %v310 = vmul.f32 %v167, %v301
    %v311 = vmul.f32 %v170, %v301
    %v312 = vmul.f32 %v172, %v301
    %v313 = vmul.f32 %v175, %v301
    %v314 = vmul.f32 %v177, %v301
    %v315 = vmul.f32 %v180, %v301
    %v316 = vmul.f32 %v182, %v301
    %v317 = vmul.f32 %v185, %v301
    %v318 = vmul.f32 %v187, %v301
    %v320 = vperm.slane %v299, 0
    %v322 = vadd.f32 %v303, %v320
    %v323 = vadd.f32 %v304, %v320
    %v324 = vadd.f32 %v305, %v320
    %v325 = vadd.f32 %v306, %v320
    %v326 = vadd.f32 %v307, %v320
    %v327 = vadd.f32 %v308, %v320
    %v328 = vadd.f32 %v309, %v320
    %v329 = vadd.f32 %v310, %v320
    %v330 = vadd.f32 %v311, %v320
    %v331 = vadd.f32 %v312, %v320
    %v332 = vadd.f32 %v313, %v320
    %v333 = vadd.f32 %v314, %v320
    %v334 = vadd.f32 %v315, %v320
    %v335 = vadd.f32 %v316, %v320
    %v336 = vadd.f32 %v317, %v320
    %v337 = vadd.f32 %v318, %v320
    %v338 = vmax.f32 %v322, -1.0
    %v339 = vmax.f32 %v323, -1.0
    %v340 = vmax.f32 %v324, -1.0
    %v341 = vmax.f32 %v325, -1.0
    %v342 = vmax.f32 %v326, -1.0
    %v343 = vmax.f32 %v327, -1.0
    %v344 = vmax.f32 %v328, -1.0
    %v345 = vmax.f32 %v329, -1.0
    %v346 = vmax.f32 %v330, -1.0
    %v347 = vmax.f32 %v331, -1.0
    %v348 = vmax.f32 %v332, -1.0
    %v349 = vmax.f32 %v333, -1.0
    %v350 = vmax.f32 %v334, -1.0
    %v351 = vmax.f32 %v335, -1.0
    %v352 = vmax.f32 %v336, -1.0
    %v353 = vmax.f32 %v337, -1.0
    %v354 = vmin.f32 %v338, 1.0
    %v355 = vmin.f32 %v339, 1.0
    %v356 = vmin.f32 %v340, 1.0
    %v357 = vmin.f32 %v341, 1.0
    %v358 = vmin.f32 %v342, 1.0
    %v359 = vmin.f32 %v343, 1.0
    %v360 = vmin.f32 %v344, 1.0
    %v361 = vmin.f32 %v345, 1.0
    %v362 = vmin.f32 %v346, 1.0
    %v363 = vmin.f32 %v347, 1.0
    %v364 = vmin.f32 %v348, 1.0
    %v365 = vmin.f32 %v349, 1.0
    %v366 = vmin.f32 %v350, 1.0
    %v367 = vmin.f32 %v351, 1.0
    %v368 = vmin.f32 %v352, 1.0
    %v369 = vmin.f32 %v353, 1.0
    %v370 = vadd.f32 %v354, %v358
    %v371 = vadd.f32 %v355, %v359
    %v372 = vadd.f32 %v356, %v360
    %v373 = vadd.f32 %v357, %v361
    %v374 = vadd.f32 %v370, %v362
    %v375 = vadd.f32 %v371, %v363
    %v376 = vadd.f32 %v372, %v364
    %v377 = vadd.f32 %v373, %v365
    %v378 = vadd.f32 %v374, %v366
    %v379 = vadd.f32 %v375, %v367
    %v380 = vadd.f32 %v376, %v368
    %v381 = vadd.f32 %v377, %v369
    %v382 = vmul.f32 %v378, 0.25
    %v383 = vmul.f32 %v379, 0.25
    %v384 = vmul.f32 %v380, 0.25
    %v385 = vmul.f32 %v381, 0.25
    %v386 = vpack.c.bf16 %v382, %v382
    %v387 = vpack.c.bf16 %v383, %v383
    %v388 = vpack.c.bf16 %v384, %v384
    %v389 = vpack.c.bf16 %v385, %v385
    %vm390 = vcmask 199680
    %391 = vst.msk [vmem:[#allocation2] sm:$0xf] %vm390, %v386
    %392 = vst.msk [vmem:[#allocation2 + $0x4] sm:$0xf] %vm390, %v387
    %393 = vst.msk [vmem:[#allocation2 + $0x8] sm:$0xf] %vm390, %v388
    %394 = vst.msk [vmem:[#allocation2 + $0xc] sm:$0xf] %vm390, %v389
    %v395 = vld [vmem:[#allocation2] sm:$0x1]
    %v396 = vld [vmem:[%s4] sm:$0xff]
    %v397 = vld [vmem:[%s4 + $0x8] sm:$0xff]
    %v398 = vld [vmem:[%s4 + $0x10] sm:$0xff]
    %v399 = vld [vmem:[%s4 + $0x18] sm:$0x11]
    %v400 = vld [vmem:[#allocation2] sm:$0x2]
    %s401 = scalar_lea.vmem %s4, 32
    %v402 = vld [vmem:[%s401] sm:$0xff]
    %v403 = vld [vmem:[%s401 + $0x8] sm:$0xff]
    %v404 = vld [vmem:[%s401 + $0x10] sm:$0xff]
    %v405 = vld [vmem:[%s401 + $0x18] sm:$0x11]
    %v407 = vunpack.c.l.b16 %v400
    %v408 = vpack.c.b16 %v407, %v407
    %v409 = vrot.slane %v408, 1
    %v414 = vunpack.c.l.b16 %v402
    %v415 = vunpack.c.h.b16 %v402
    %v416 = vunpack.c.l.b16 %v403
    %v417 = vunpack.c.h.b16 %v403
    %v418 = vunpack.c.l.b16 %v404
    %v419 = vunpack.c.h.b16 %v404
    %v420 = vunpack.c.l.b16 %v405
    %v421 = vunpack.c.h.b16 %v405
    %v422 = vpack.c.b16 %v416, %v414
    %v423 = vpack.c.b16 %v417, %v415
    %v424 = vpack.c.b16 %v420, %v418
    %v425 = vpack.c.b16 %v421, %v419
    %v429 = vsel %vm189, %v409, 0
    %vm431 = vcmask 1043456
    %v432 = vsel %vm431, 4294967295, 65535
    %v433 = vsel %vm133, %v432, 0
    %v435 = vand.u32 %v424, %v433
    %v438 = vand.u32 %v425, %v433
    %440 = vmatpush.bf16.msra.mxu0 0
    %441 = vmatpush.bf16.msra.mxu0 0
    %442 = vmatpush.bf16.msra.mxu0 0
    %443 = vmatpush.bf16.msra.mxu0 0
    %444 = vmatpush.bf16.msra.mxu0 0
    %445 = vmatpush.bf16.msra.mxu0 0
    %446 = vmatpush.bf16.msra.mxu0 %v435
    %447 = vmatpush.bf16.msra.mxu0 %v422
    %448 = vmatmul.bf16.gmra.mxu0 %v429
    %v449 = vpop.f32.mrf.mxu0
    %v450 = vadd.f32 0.0, %v449
    %v451 = vpop.f32.mrf.mxu0
    %452 = vdwg.mxu0
    %453 = vmatpush.bf16.msra.mxu0 0
    %454 = vmatpush.bf16.msra.mxu0 0
    %455 = vmatpush.bf16.msra.mxu0 0
    %456 = vmatpush.bf16.msra.mxu0 0
    %457 = vmatpush.bf16.msra.mxu0 0
    %458 = vmatpush.bf16.msra.mxu0 0
    %459 = vmatpush.bf16.msra.mxu0 %v438
    %460 = vmatpush.bf16.msra.mxu0 %v423
    %461 = vmatmul.bf16.gmra.mxu0 %v429
    %v462 = vpop.f32.mrf.mxu0
    %v463 = vadd.f32 0.0, %v462
    %v464 = vpop.f32.mrf.mxu0
    %465 = vdwg.mxu0
    %v470 = vunpack.c.l.b16 %v396
    %v471 = vunpack.c.h.b16 %v396
    %v472 = vunpack.c.l.b16 %v397
    %v473 = vunpack.c.h.b16 %v397
    %v474 = vunpack.c.l.b16 %v398
    %v475 = vunpack.c.h.b16 %v398
    %v476 = vunpack.c.l.b16 %v399
    %v477 = vunpack.c.h.b16 %v399
    %v478 = vpack.c.b16 %v472, %v470
    %v479 = vpack.c.b16 %v473, %v471
    %v480 = vpack.c.b16 %v476, %v474
    %v481 = vpack.c.b16 %v477, %v475
    %v485 = vsel %vm189, %v395, 0
    %v488 = vand.u32 %v480, %v433
    %v491 = vand.u32 %v481, %v433
    %493 = vmatpush.bf16.msra.mxu0 0
    %494 = vmatpush.bf16.msra.mxu0 0
    %495 = vmatpush.bf16.msra.mxu0 0
    %496 = vmatpush.bf16.msra.mxu0 0
    %497 = vmatpush.bf16.msra.mxu0 0
    %498 = vmatpush.bf16.msra.mxu0 0
    %499 = vmatpush.bf16.msra.mxu0 %v488
    %500 = vmatpush.bf16.msra.mxu0 %v478
    %501 = vmatmul.bf16.gmra.mxu0 %v485
    %v502 = vpop.f32.mrf.mxu0
    %v503 = vadd.f32 %v450, %v502
    %v504 = vpop.f32.mrf.mxu0
    %505 = vdwg.mxu0
    %506 = vmatpush.bf16.msra.mxu0 0
    %507 = vmatpush.bf16.msra.mxu0 0
    %508 = vmatpush.bf16.msra.mxu0 0
    %509 = vmatpush.bf16.msra.mxu0 0
    %510 = vmatpush.bf16.msra.mxu0 0
    %511 = vmatpush.bf16.msra.mxu0 0
    %512 = vmatpush.bf16.msra.mxu0 %v491
    %513 = vmatpush.bf16.msra.mxu0 %v479
    %514 = vmatmul.bf16.gmra.mxu0 %v485
    %v515 = vpop.f32.mrf.mxu0
    %v516 = vadd.f32 %v463, %v515
    %v517 = vpop.f32.mrf.mxu0
    %518 = vdwg.mxu0
    %v519 = vld [vmem:[#allocation2] sm:$0x4]
    %s520 = scalar_lea.vmem %s4, 64
    %v521 = vld [vmem:[%s520] sm:$0xff]
    %v522 = vld [vmem:[%s520 + $0x8] sm:$0xff]
    %v523 = vld [vmem:[%s520 + $0x10] sm:$0xff]
    %v524 = vld [vmem:[%s520 + $0x18] sm:$0x11]
    %v526 = vunpack.c.l.b16 %v519
    %v527 = vpack.c.b16 %v526, %v526
    %v528 = vrot.slane %v527, 2
    %v533 = vunpack.c.l.b16 %v521
    %v534 = vunpack.c.h.b16 %v521
    %v535 = vunpack.c.l.b16 %v522
    %v536 = vunpack.c.h.b16 %v522
    %v537 = vunpack.c.l.b16 %v523
    %v538 = vunpack.c.h.b16 %v523
    %v539 = vunpack.c.l.b16 %v524
    %v540 = vunpack.c.h.b16 %v524
    %v541 = vpack.c.b16 %v535, %v533
    %v542 = vpack.c.b16 %v536, %v534
    %v543 = vpack.c.b16 %v539, %v537
    %v544 = vpack.c.b16 %v540, %v538
    %v548 = vsel %vm189, %v528, 0
    %v551 = vand.u32 %v543, %v433
    %v554 = vand.u32 %v544, %v433
    %556 = vmatpush.bf16.msra.mxu0 0
    %557 = vmatpush.bf16.msra.mxu0 0
    %558 = vmatpush.bf16.msra.mxu0 0
    %559 = vmatpush.bf16.msra.mxu0 0
    %560 = vmatpush.bf16.msra.mxu0 0
    %561 = vmatpush.bf16.msra.mxu0 0
    %562 = vmatpush.bf16.msra.mxu0 %v551
    %563 = vmatpush.bf16.msra.mxu0 %v541
    %564 = vmatmul.bf16.gmra.mxu0 %v548
    %v565 = vpop.f32.mrf.mxu0
    %v566 = vadd.f32 0.0, %v565
    %v567 = vpop.f32.mrf.mxu0
    %568 = vdwg.mxu0
    %569 = vmatpush.bf16.msra.mxu0 0
    %570 = vmatpush.bf16.msra.mxu0 0
    %571 = vmatpush.bf16.msra.mxu0 0
    %572 = vmatpush.bf16.msra.mxu0 0
    %573 = vmatpush.bf16.msra.mxu0 0
    %574 = vmatpush.bf16.msra.mxu0 0
    %575 = vmatpush.bf16.msra.mxu0 %v554
    %576 = vmatpush.bf16.msra.mxu0 %v542
    %577 = vmatmul.bf16.gmra.mxu0 %v548
    %v578 = vpop.f32.mrf.mxu0
    %v579 = vadd.f32 0.0, %v578
    %v580 = vpop.f32.mrf.mxu0
    %581 = vdwg.mxu0
    %v582 = vadd.f32 %v503, %v566
    %v583 = vadd.f32 %v516, %v579
    %v584 = vld [vmem:[#allocation2] sm:$0x8]
    %s585 = scalar_lea.vmem %s4, 96
    %v586 = vld [vmem:[%s585] sm:$0xff]
    %v587 = vld [vmem:[%s585 + $0x8] sm:$0xff]
    %v588 = vld [vmem:[%s585 + $0x10] sm:$0xff]
    %v589 = vld [vmem:[%s585 + $0x18] sm:$0x11]
    %v591 = vunpack.c.l.b16 %v584
    %v592 = vpack.c.b16 %v591, %v591
    %v593 = vrot.slane %v592, 3
    %v598 = vunpack.c.l.b16 %v586
    %v599 = vunpack.c.h.b16 %v586
    %v600 = vunpack.c.l.b16 %v587
    %v601 = vunpack.c.h.b16 %v587
    %v602 = vunpack.c.l.b16 %v588
    %v603 = vunpack.c.h.b16 %v588
    %v604 = vunpack.c.l.b16 %v589
    %v605 = vunpack.c.h.b16 %v589
    %v606 = vpack.c.b16 %v600, %v598
    %v607 = vpack.c.b16 %v601, %v599
    %v608 = vpack.c.b16 %v604, %v602
    %v609 = vpack.c.b16 %v605, %v603
    %v613 = vsel %vm189, %v593, 0
    %v616 = vand.u32 %v608, %v433
    %v619 = vand.u32 %v609, %v433
    %621 = vmatpush.bf16.msra.mxu0 0
    %622 = vmatpush.bf16.msra.mxu0 0
    %623 = vmatpush.bf16.msra.mxu0 0
    %624 = vmatpush.bf16.msra.mxu0 0
    %625 = vmatpush.bf16.msra.mxu0 0
    %626 = vmatpush.bf16.msra.mxu0 0
    %627 = vmatpush.bf16.msra.mxu0 %v616
    %628 = vmatpush.bf16.msra.mxu0 %v606
    %629 = vmatmul.bf16.gmra.mxu0 %v613
    %v630 = vpop.f32.mrf.mxu0
    %v631 = vadd.f32 0.0, %v630
    %v632 = vpop.f32.mrf.mxu0
    %633 = vdwg.mxu0
    %634 = vmatpush.bf16.msra.mxu0 0
    %635 = vmatpush.bf16.msra.mxu0 0
    %636 = vmatpush.bf16.msra.mxu0 0
    %637 = vmatpush.bf16.msra.mxu0 0
    %638 = vmatpush.bf16.msra.mxu0 0
    %639 = vmatpush.bf16.msra.mxu0 0
    %640 = vmatpush.bf16.msra.mxu0 %v619
    %641 = vmatpush.bf16.msra.mxu0 %v607
    %642 = vmatmul.bf16.gmra.mxu0 %v613
    %v643 = vpop.f32.mrf.mxu0
    %v644 = vadd.f32 0.0, %v643
    %v645 = vpop.f32.mrf.mxu0
    %646 = vdwg.mxu0
    %v647 = vadd.f32 %v582, %v631
    %v648 = vadd.f32 %v583, %v644
    %v649 = vld [vmem:[#allocation2 + $0x4] sm:$0x1]
    %s650 = scalar_lea.vmem %s4, 128
    %v651 = vld [vmem:[%s650] sm:$0xff]
    %v652 = vld [vmem:[%s650 + $0x8] sm:$0xff]
    %v653 = vld [vmem:[%s650 + $0x10] sm:$0xff]
    %v654 = vld [vmem:[%s650 + $0x18] sm:$0x11]
    %v659 = vunpack.c.l.b16 %v651
    %v660 = vunpack.c.h.b16 %v651
    %v661 = vunpack.c.l.b16 %v652
    %v662 = vunpack.c.h.b16 %v652
    %v663 = vunpack.c.l.b16 %v653
    %v664 = vunpack.c.h.b16 %v653
    %v665 = vunpack.c.l.b16 %v654
    %v666 = vunpack.c.h.b16 %v654
    %v667 = vpack.c.b16 %v661, %v659
    %v668 = vpack.c.b16 %v662, %v660
    %v669 = vpack.c.b16 %v665, %v663
    %v670 = vpack.c.b16 %v666, %v664
    %v674 = vsel %vm189, %v649, 0
    %v677 = vand.u32 %v669, %v433
    %v680 = vand.u32 %v670, %v433
    %682 = vmatpush.bf16.msra.mxu0 0
    %683 = vmatpush.bf16.msra.mxu0 0
    %684 = vmatpush.bf16.msra.mxu0 0
    %685 = vmatpush.bf16.msra.mxu0 0
    %686 = vmatpush.bf16.msra.mxu0 0
    %687 = vmatpush.bf16.msra.mxu0 0
    %688 = vmatpush.bf16.msra.mxu0 %v677
    %689 = vmatpush.bf16.msra.mxu0 %v667
    %690 = vmatmul.bf16.gmra.mxu0 %v674
    %v691 = vpop.f32.mrf.mxu0
    %v692 = vadd.f32 0.0, %v691
    %v693 = vpop.f32.mrf.mxu0
    %694 = vdwg.mxu0
    %695 = vmatpush.bf16.msra.mxu0 0
    %696 = vmatpush.bf16.msra.mxu0 0
    %697 = vmatpush.bf16.msra.mxu0 0
    %698 = vmatpush.bf16.msra.mxu0 0
    %699 = vmatpush.bf16.msra.mxu0 0
    %700 = vmatpush.bf16.msra.mxu0 0
    %701 = vmatpush.bf16.msra.mxu0 %v680
    %702 = vmatpush.bf16.msra.mxu0 %v668
    %703 = vmatmul.bf16.gmra.mxu0 %v674
    %v704 = vpop.f32.mrf.mxu0
    %v705 = vadd.f32 0.0, %v704
    %v706 = vpop.f32.mrf.mxu0
    %707 = vdwg.mxu0
    %v708 = vadd.f32 %v647, %v692
    %v709 = vadd.f32 %v648, %v705
    %v710 = vld [vmem:[#allocation2 + $0x4] sm:$0x2]
    %s711 = scalar_lea.vmem %s4, 160
    %v712 = vld [vmem:[%s711] sm:$0xff]
    %v713 = vld [vmem:[%s711 + $0x8] sm:$0xff]
    %v714 = vld [vmem:[%s711 + $0x10] sm:$0xff]
    %v715 = vld [vmem:[%s711 + $0x18] sm:$0x11]
    %v717 = vunpack.c.l.b16 %v710
    %v718 = vpack.c.b16 %v717, %v717
    %v719 = vrot.slane %v718, 1
    %v724 = vunpack.c.l.b16 %v712
    %v725 = vunpack.c.h.b16 %v712
    %v726 = vunpack.c.l.b16 %v713
    %v727 = vunpack.c.h.b16 %v713
    %v728 = vunpack.c.l.b16 %v714
    %v729 = vunpack.c.h.b16 %v714
    %v730 = vunpack.c.l.b16 %v715
    %v731 = vunpack.c.h.b16 %v715
    %v732 = vpack.c.b16 %v726, %v724
    %v733 = vpack.c.b16 %v727, %v725
    %v734 = vpack.c.b16 %v730, %v728
    %v735 = vpack.c.b16 %v731, %v729
    %v739 = vsel %vm189, %v719, 0
    %v742 = vand.u32 %v734, %v433
    %v745 = vand.u32 %v735, %v433
    %747 = vmatpush.bf16.msra.mxu0 0
    %748 = vmatpush.bf16.msra.mxu0 0
    %749 = vmatpush.bf16.msra.mxu0 0
    %750 = vmatpush.bf16.msra.mxu0 0
    %751 = vmatpush.bf16.msra.mxu0 0
    %752 = vmatpush.bf16.msra.mxu0 0
    %753 = vmatpush.bf16.msra.mxu0 %v742
    %754 = vmatpush.bf16.msra.mxu0 %v732
    %755 = vmatmul.bf16.gmra.mxu0 %v739
    %v756 = vpop.f32.mrf.mxu0
    %v757 = vadd.f32 0.0, %v756
    %v758 = vpop.f32.mrf.mxu0
    %759 = vdwg.mxu0
    %760 = vmatpush.bf16.msra.mxu0 0
    %761 = vmatpush.bf16.msra.mxu0 0
    %762 = vmatpush.bf16.msra.mxu0 0
    %763 = vmatpush.bf16.msra.mxu0 0
    %764 = vmatpush.bf16.msra.mxu0 0
    %765 = vmatpush.bf16.msra.mxu0 0
    %766 = vmatpush.bf16.msra.mxu0 %v745
    %767 = vmatpush.bf16.msra.mxu0 %v733
    %768 = vmatmul.bf16.gmra.mxu0 %v739
    %v769 = vpop.f32.mrf.mxu0
    %v770 = vadd.f32 0.0, %v769
    %v771 = vpop.f32.mrf.mxu0
    %772 = vdwg.mxu0
    %v773 = vadd.f32 %v708, %v757
    %v774 = vadd.f32 %v709, %v770
    %v775 = vld [vmem:[#allocation2 + $0x4] sm:$0x4]
    %s776 = scalar_lea.vmem %s4, 192
    %v777 = vld [vmem:[%s776] sm:$0xff]
    %v778 = vld [vmem:[%s776 + $0x8] sm:$0xff]
    %v779 = vld [vmem:[%s776 + $0x10] sm:$0xff]
    %v780 = vld [vmem:[%s776 + $0x18] sm:$0x11]
    %v782 = vunpack.c.l.b16 %v775
    %v783 = vpack.c.b16 %v782, %v782
    %v784 = vrot.slane %v783, 2
    %v789 = vunpack.c.l.b16 %v777
    %v790 = vunpack.c.h.b16 %v777
    %v791 = vunpack.c.l.b16 %v778
    %v792 = vunpack.c.h.b16 %v778
    %v793 = vunpack.c.l.b16 %v779
    %v794 = vunpack.c.h.b16 %v779
    %v795 = vunpack.c.l.b16 %v780
    %v796 = vunpack.c.h.b16 %v780
    %v797 = vpack.c.b16 %v791, %v789
    %v798 = vpack.c.b16 %v792, %v790
    %v799 = vpack.c.b16 %v795, %v793
    %v800 = vpack.c.b16 %v796, %v794
    %v804 = vsel %vm189, %v784, 0
    %v807 = vand.u32 %v799, %v433
    %v810 = vand.u32 %v800, %v433
    %812 = vmatpush.bf16.msra.mxu0 0
    %813 = vmatpush.bf16.msra.mxu0 0
    %814 = vmatpush.bf16.msra.mxu0 0
    %815 = vmatpush.bf16.msra.mxu0 0
    %816 = vmatpush.bf16.msra.mxu0 0
    %817 = vmatpush.bf16.msra.mxu0 0
    %818 = vmatpush.bf16.msra.mxu0 %v807
    %819 = vmatpush.bf16.msra.mxu0 %v797
    %820 = vmatmul.bf16.gmra.mxu0 %v804
    %v821 = vpop.f32.mrf.mxu0
    %v822 = vadd.f32 0.0, %v821
    %v823 = vpop.f32.mrf.mxu0
    %824 = vdwg.mxu0
    %825 = vmatpush.bf16.msra.mxu0 0
    %826 = vmatpush.bf16.msra.mxu0 0
    %827 = vmatpush.bf16.msra.mxu0 0
    %828 = vmatpush.bf16.msra.mxu0 0
    %829 = vmatpush.bf16.msra.mxu0 0
    %830 = vmatpush.bf16.msra.mxu0 0
    %831 = vmatpush.bf16.msra.mxu0 %v810
    %832 = vmatpush.bf16.msra.mxu0 %v798
    %833 = vmatmul.bf16.gmra.mxu0 %v804
    %v834 = vpop.f32.mrf.mxu0
    %v835 = vadd.f32 0.0, %v834
    %v836 = vpop.f32.mrf.mxu0
    %837 = vdwg.mxu0
    %v838 = vadd.f32 %v773, %v822
    %v839 = vadd.f32 %v774, %v835
    %v840 = vld [vmem:[#allocation2 + $0x4] sm:$0x8]
    %s841 = scalar_lea.vmem %s4, 224
    %v842 = vld [vmem:[%s841] sm:$0xff]
    %v843 = vld [vmem:[%s841 + $0x8] sm:$0xff]
    %v844 = vld [vmem:[%s841 + $0x10] sm:$0xff]
    %v845 = vld [vmem:[%s841 + $0x18] sm:$0x11]
    %v847 = vunpack.c.l.b16 %v840
    %v848 = vpack.c.b16 %v847, %v847
    %v849 = vrot.slane %v848, 3
    %v854 = vunpack.c.l.b16 %v842
    %v855 = vunpack.c.h.b16 %v842
    %v856 = vunpack.c.l.b16 %v843
    %v857 = vunpack.c.h.b16 %v843
    %v858 = vunpack.c.l.b16 %v844
    %v859 = vunpack.c.h.b16 %v844
    %v860 = vunpack.c.l.b16 %v845
    %v861 = vunpack.c.h.b16 %v845
    %v862 = vpack.c.b16 %v856, %v854
    %v863 = vpack.c.b16 %v857, %v855
    %v864 = vpack.c.b16 %v860, %v858
    %v865 = vpack.c.b16 %v861, %v859
    %v869 = vsel %vm189, %v849, 0
    %v872 = vand.u32 %v864, %v433
    %v875 = vand.u32 %v865, %v433
    %877 = vmatpush.bf16.msra.mxu0 0
    %878 = vmatpush.bf16.msra.mxu0 0
    %879 = vmatpush.bf16.msra.mxu0 0
    %880 = vmatpush.bf16.msra.mxu0 0
    %881 = vmatpush.bf16.msra.mxu0 0
    %882 = vmatpush.bf16.msra.mxu0 0
    %883 = vmatpush.bf16.msra.mxu0 %v872
    %884 = vmatpush.bf16.msra.mxu0 %v862
    %885 = vmatmul.bf16.gmra.mxu0 %v869
    %v886 = vpop.f32.mrf.mxu0
    %v887 = vadd.f32 0.0, %v886
    %v888 = vpop.f32.mrf.mxu0
    %889 = vdwg.mxu0
    %890 = vmatpush.bf16.msra.mxu0 0
    %891 = vmatpush.bf16.msra.mxu0 0
    %892 = vmatpush.bf16.msra.mxu0 0
    %893 = vmatpush.bf16.msra.mxu0 0
    %894 = vmatpush.bf16.msra.mxu0 0
    %895 = vmatpush.bf16.msra.mxu0 0
    %896 = vmatpush.bf16.msra.mxu0 %v875
    %897 = vmatpush.bf16.msra.mxu0 %v863
    %898 = vmatmul.bf16.gmra.mxu0 %v869
    %v899 = vpop.f32.mrf.mxu0
    %v900 = vadd.f32 0.0, %v899
    %v901 = vpop.f32.mrf.mxu0
    %902 = vdwg.mxu0
    %v903 = vadd.f32 %v838, %v887
    %v904 = vadd.f32 %v839, %v900
    %v905 = vld [vmem:[#allocation2 + $0x8] sm:$0x1]
    %s906 = scalar_lea.vmem %s4, 256
    %v907 = vld [vmem:[%s906] sm:$0xff]
    %v908 = vld [vmem:[%s906 + $0x8] sm:$0xff]
    %v909 = vld [vmem:[%s906 + $0x10] sm:$0xff]
    %v910 = vld [vmem:[%s906 + $0x18] sm:$0x11]
    %v915 = vunpack.c.l.b16 %v907
    %v916 = vunpack.c.h.b16 %v907
    %v917 = vunpack.c.l.b16 %v908
    %v918 = vunpack.c.h.b16 %v908
    %v919 = vunpack.c.l.b16 %v909
    %v920 = vunpack.c.h.b16 %v909
    %v921 = vunpack.c.l.b16 %v910
    %v922 = vunpack.c.h.b16 %v910
    %v923 = vpack.c.b16 %v917, %v915
    %v924 = vpack.c.b16 %v918, %v916
    %v925 = vpack.c.b16 %v921, %v919
    %v926 = vpack.c.b16 %v922, %v920
    %v930 = vsel %vm189, %v905, 0
    %v933 = vand.u32 %v925, %v433
    %v936 = vand.u32 %v926, %v433
    %938 = vmatpush.bf16.msra.mxu0 0
    %939 = vmatpush.bf16.msra.mxu0 0
    %940 = vmatpush.bf16.msra.mxu0 0
    %941 = vmatpush.bf16.msra.mxu0 0
    %942 = vmatpush.bf16.msra.mxu0 0
    %943 = vmatpush.bf16.msra.mxu0 0
    %944 = vmatpush.bf16.msra.mxu0 %v933
    %945 = vmatpush.bf16.msra.mxu0 %v923
    %946 = vmatmul.bf16.gmra.mxu0 %v930
    %v947 = vpop.f32.mrf.mxu0
    %v948 = vadd.f32 0.0, %v947
    %v949 = vpop.f32.mrf.mxu0
    %950 = vdwg.mxu0
    %951 = vmatpush.bf16.msra.mxu0 0
    %952 = vmatpush.bf16.msra.mxu0 0
    %953 = vmatpush.bf16.msra.mxu0 0
    %954 = vmatpush.bf16.msra.mxu0 0
    %955 = vmatpush.bf16.msra.mxu0 0
    %956 = vmatpush.bf16.msra.mxu0 0
    %957 = vmatpush.bf16.msra.mxu0 %v936
    %958 = vmatpush.bf16.msra.mxu0 %v924
    %959 = vmatmul.bf16.gmra.mxu0 %v930
    %v960 = vpop.f32.mrf.mxu0
    %v961 = vadd.f32 0.0, %v960
    %v962 = vpop.f32.mrf.mxu0
    %963 = vdwg.mxu0
    %v964 = vadd.f32 %v903, %v948
    %v965 = vadd.f32 %v904, %v961
    %v966 = vld [vmem:[#allocation2 + $0x8] sm:$0x2]
    %s967 = scalar_lea.vmem %s4, 288
    %v968 = vld [vmem:[%s967] sm:$0xff]
    %v969 = vld [vmem:[%s967 + $0x8] sm:$0xff]
    %v970 = vld [vmem:[%s967 + $0x10] sm:$0xff]
    %v971 = vld [vmem:[%s967 + $0x18] sm:$0x11]
    %v973 = vunpack.c.l.b16 %v966
    %v974 = vpack.c.b16 %v973, %v973
    %v975 = vrot.slane %v974, 1
    %v980 = vunpack.c.l.b16 %v968
    %v981 = vunpack.c.h.b16 %v968
    %v982 = vunpack.c.l.b16 %v969
    %v983 = vunpack.c.h.b16 %v969
    %v984 = vunpack.c.l.b16 %v970
    %v985 = vunpack.c.h.b16 %v970
    %v986 = vunpack.c.l.b16 %v971
    %v987 = vunpack.c.h.b16 %v971
    %v988 = vpack.c.b16 %v982, %v980
    %v989 = vpack.c.b16 %v983, %v981
    %v990 = vpack.c.b16 %v986, %v984
    %v991 = vpack.c.b16 %v987, %v985
    %v995 = vsel %vm189, %v975, 0
    %v998 = vand.u32 %v990, %v433
    %v1001 = vand.u32 %v991, %v433
    %1003 = vmatpush.bf16.msra.mxu0 0
    %1004 = vmatpush.bf16.msra.mxu0 0
    %1005 = vmatpush.bf16.msra.mxu0 0
    %1006 = vmatpush.bf16.msra.mxu0 0
    %1007 = vmatpush.bf16.msra.mxu0 0
    %1008 = vmatpush.bf16.msra.mxu0 0
    %1009 = vmatpush.bf16.msra.mxu0 %v998
    %1010 = vmatpush.bf16.msra.mxu0 %v988
    %1011 = vmatmul.bf16.gmra.mxu0 %v995
    %v1012 = vpop.f32.mrf.mxu0
    %v1013 = vadd.f32 0.0, %v1012
    %v1014 = vpop.f32.mrf.mxu0
    %1015 = vdwg.mxu0
    %1016 = vmatpush.bf16.msra.mxu0 0
    %1017 = vmatpush.bf16.msra.mxu0 0
    %1018 = vmatpush.bf16.msra.mxu0 0
    %1019 = vmatpush.bf16.msra.mxu0 0
    %1020 = vmatpush.bf16.msra.mxu0 0
    %1021 = vmatpush.bf16.msra.mxu0 0
    %1022 = vmatpush.bf16.msra.mxu0 %v1001
    %1023 = vmatpush.bf16.msra.mxu0 %v989
    %1024 = vmatmul.bf16.gmra.mxu0 %v995
    %v1025 = vpop.f32.mrf.mxu0
    %v1026 = vadd.f32 0.0, %v1025
    %v1027 = vpop.f32.mrf.mxu0
    %1028 = vdwg.mxu0
    %v1029 = vadd.f32 %v964, %v1013
    %v1030 = vadd.f32 %v965, %v1026
    %v1031 = vld [vmem:[#allocation2 + $0x8] sm:$0x4]
    %s1032 = scalar_lea.vmem %s4, 320
    %v1033 = vld [vmem:[%s1032] sm:$0xff]
    %v1034 = vld [vmem:[%s1032 + $0x8] sm:$0xff]
    %v1035 = vld [vmem:[%s1032 + $0x10] sm:$0xff]
    %v1036 = vld [vmem:[%s1032 + $0x18] sm:$0x11]
    %v1038 = vunpack.c.l.b16 %v1031
    %v1039 = vpack.c.b16 %v1038, %v1038
    %v1040 = vrot.slane %v1039, 2
    %v1045 = vunpack.c.l.b16 %v1033
    %v1046 = vunpack.c.h.b16 %v1033
    %v1047 = vunpack.c.l.b16 %v1034
    %v1048 = vunpack.c.h.b16 %v1034
    %v1049 = vunpack.c.l.b16 %v1035
    %v1050 = vunpack.c.h.b16 %v1035
    %v1051 = vunpack.c.l.b16 %v1036
    %v1052 = vunpack.c.h.b16 %v1036
    %v1053 = vpack.c.b16 %v1047, %v1045
    %v1054 = vpack.c.b16 %v1048, %v1046
    %v1055 = vpack.c.b16 %v1051, %v1049
    %v1056 = vpack.c.b16 %v1052, %v1050
    %v1060 = vsel %vm189, %v1040, 0
    %v1063 = vand.u32 %v1055, %v433
    %v1066 = vand.u32 %v1056, %v433
    %1068 = vmatpush.bf16.msra.mxu0 0
    %1069 = vmatpush.bf16.msra.mxu0 0
    %1070 = vmatpush.bf16.msra.mxu0 0
    %1071 = vmatpush.bf16.msra.mxu0 0
    %1072 = vmatpush.bf16.msra.mxu0 0
    %1073 = vmatpush.bf16.msra.mxu0 0
    %1074 = vmatpush.bf16.msra.mxu0 %v1063
    %1075 = vmatpush.bf16.msra.mxu0 %v1053
    %1076 = vmatmul.bf16.gmra.mxu0 %v1060
    %v1077 = vpop.f32.mrf.mxu0
    %v1078 = vadd.f32 0.0, %v1077
    %v1079 = vpop.f32.mrf.mxu0
    %1080 = vdwg.mxu0
    %1081 = vmatpush.bf16.msra.mxu0 0
    %1082 = vmatpush.bf16.msra.mxu0 0
    %1083 = vmatpush.bf16.msra.mxu0 0
    %1084 = vmatpush.bf16.msra.mxu0 0
    %1085 = vmatpush.bf16.msra.mxu0 0
    %1086 = vmatpush.bf16.msra.mxu0 0
    %1087 = vmatpush.bf16.msra.mxu0 %v1066
    %1088 = vmatpush.bf16.msra.mxu0 %v1054
    %1089 = vmatmul.bf16.gmra.mxu0 %v1060
    %v1090 = vpop.f32.mrf.mxu0
    %v1091 = vadd.f32 0.0, %v1090
    %v1092 = vpop.f32.mrf.mxu0
    %1093 = vdwg.mxu0
    %v1094 = vadd.f32 %v1029, %v1078
    %v1095 = vadd.f32 %v1030, %v1091
    %v1096 = vld [vmem:[#allocation2 + $0x8] sm:$0x8]
    %s1097 = scalar_lea.vmem %s4, 352
    %v1098 = vld [vmem:[%s1097] sm:$0xff]
    %v1099 = vld [vmem:[%s1097 + $0x8] sm:$0xff]
    %v1100 = vld [vmem:[%s1097 + $0x10] sm:$0xff]
    %v1101 = vld [vmem:[%s1097 + $0x18] sm:$0x11]
    %v1103 = vunpack.c.l.b16 %v1096
    %v1104 = vpack.c.b16 %v1103, %v1103
    %v1105 = vrot.slane %v1104, 3
    %v1110 = vunpack.c.l.b16 %v1098
    %v1111 = vunpack.c.h.b16 %v1098
    %v1112 = vunpack.c.l.b16 %v1099
    %v1113 = vunpack.c.h.b16 %v1099
    %v1114 = vunpack.c.l.b16 %v1100
    %v1115 = vunpack.c.h.b16 %v1100
    %v1116 = vunpack.c.l.b16 %v1101
    %v1117 = vunpack.c.h.b16 %v1101
    %v1118 = vpack.c.b16 %v1112, %v1110
    %v1119 = vpack.c.b16 %v1113, %v1111
    %v1120 = vpack.c.b16 %v1116, %v1114
    %v1121 = vpack.c.b16 %v1117, %v1115
    %v1125 = vsel %vm189, %v1105, 0
    %v1128 = vand.u32 %v1120, %v433
    %v1131 = vand.u32 %v1121, %v433
    %1133 = vmatpush.bf16.msra.mxu0 0
    %1134 = vmatpush.bf16.msra.mxu0 0
    %1135 = vmatpush.bf16.msra.mxu0 0
    %1136 = vmatpush.bf16.msra.mxu0 0
    %1137 = vmatpush.bf16.msra.mxu0 0
    %1138 = vmatpush.bf16.msra.mxu0 0
    %1139 = vmatpush.bf16.msra.mxu0 %v1128
    %1140 = vmatpush.bf16.msra.mxu0 %v1118
    %1141 = vmatmul.bf16.gmra.mxu0 %v1125
    %v1142 = vpop.f32.mrf.mxu0
    %v1143 = vadd.f32 0.0, %v1142
    %v1144 = vpop.f32.mrf.mxu0
    %1145 = vdwg.mxu0
    %1146 = vmatpush.bf16.msra.mxu0 0
    %1147 = vmatpush.bf16.msra.mxu0 0
    %1148 = vmatpush.bf16.msra.mxu0 0
    %1149 = vmatpush.bf16.msra.mxu0 0
    %1150 = vmatpush.bf16.msra.mxu0 0
    %1151 = vmatpush.bf16.msra.mxu0 0
    %1152 = vmatpush.bf16.msra.mxu0 %v1131
    %1153 = vmatpush.bf16.msra.mxu0 %v1119
    %1154 = vmatmul.bf16.gmra.mxu0 %v1125
    %v1155 = vpop.f32.mrf.mxu0
    %v1156 = vadd.f32 0.0, %v1155
    %v1157 = vpop.f32.mrf.mxu0
    %1158 = vdwg.mxu0
    %v1159 = vadd.f32 %v1094, %v1143
    %v1160 = vadd.f32 %v1095, %v1156
    %v1161 = vld [vmem:[#allocation2 + $0xc] sm:$0x1]
    %s1162 = scalar_lea.vmem %s4, 384
    %v1163 = vld [vmem:[%s1162] sm:$0xff]
    %v1164 = vld [vmem:[%s1162 + $0x8] sm:$0xff]
    %v1165 = vld [vmem:[%s1162 + $0x10] sm:$0xff]
    %v1166 = vld [vmem:[%s1162 + $0x18] sm:$0x11]
    %v1171 = vunpack.c.l.b16 %v1163
    %v1172 = vunpack.c.h.b16 %v1163
    %v1173 = vunpack.c.l.b16 %v1164
    %v1174 = vunpack.c.h.b16 %v1164
    %v1175 = vunpack.c.l.b16 %v1165
    %v1176 = vunpack.c.h.b16 %v1165
    %v1177 = vunpack.c.l.b16 %v1166
    %v1178 = vunpack.c.h.b16 %v1166
    %v1179 = vpack.c.b16 %v1173, %v1171
    %v1180 = vpack.c.b16 %v1174, %v1172
    %v1181 = vpack.c.b16 %v1177, %v1175
    %v1182 = vpack.c.b16 %v1178, %v1176
    %v1186 = vsel %vm189, %v1161, 0
    %v1189 = vand.u32 %v1181, %v433
    %v1192 = vand.u32 %v1182, %v433
    %1194 = vmatpush.bf16.msra.mxu0 0
    %1195 = vmatpush.bf16.msra.mxu0 0
    %1196 = vmatpush.bf16.msra.mxu0 0
    %1197 = vmatpush.bf16.msra.mxu0 0
    %1198 = vmatpush.bf16.msra.mxu0 0
    %1199 = vmatpush.bf16.msra.mxu0 0
    %1200 = vmatpush.bf16.msra.mxu0 %v1189
    %1201 = vmatpush.bf16.msra.mxu0 %v1179
    %1202 = vmatmul.bf16.gmra.mxu0 %v1186
    %v1203 = vpop.f32.mrf.mxu0
    %v1204 = vadd.f32 0.0, %v1203
    %v1205 = vpop.f32.mrf.mxu0
    %1206 = vdwg.mxu0
    %1207 = vmatpush.bf16.msra.mxu0 0
    %1208 = vmatpush.bf16.msra.mxu0 0
    %1209 = vmatpush.bf16.msra.mxu0 0
    %1210 = vmatpush.bf16.msra.mxu0 0
    %1211 = vmatpush.bf16.msra.mxu0 0
    %1212 = vmatpush.bf16.msra.mxu0 0
    %1213 = vmatpush.bf16.msra.mxu0 %v1192
    %1214 = vmatpush.bf16.msra.mxu0 %v1180
    %1215 = vmatmul.bf16.gmra.mxu0 %v1186
    %v1216 = vpop.f32.mrf.mxu0
    %v1217 = vadd.f32 0.0, %v1216
    %v1218 = vpop.f32.mrf.mxu0
    %1219 = vdwg.mxu0
    %v1220 = vadd.f32 %v1159, %v1204
    %v1221 = vadd.f32 %v1160, %v1217
    %v1222 = vld [vmem:[#allocation2 + $0xc] sm:$0x2]
    %s1223 = scalar_lea.vmem %s4, 416
    %v1224 = vld [vmem:[%s1223] sm:$0xff]
    %v1225 = vld [vmem:[%s1223 + $0x8] sm:$0xff]
    %v1226 = vld [vmem:[%s1223 + $0x10] sm:$0xff]
    %v1227 = vld [vmem:[%s1223 + $0x18] sm:$0x11]
    %v1229 = vunpack.c.l.b16 %v1222
    %v1230 = vpack.c.b16 %v1229, %v1229
    %v1231 = vrot.slane %v1230, 1
    %v1236 = vunpack.c.l.b16 %v1224
    %v1237 = vunpack.c.h.b16 %v1224
    %v1238 = vunpack.c.l.b16 %v1225
    %v1239 = vunpack.c.h.b16 %v1225
    %v1240 = vunpack.c.l.b16 %v1226
    %v1241 = vunpack.c.h.b16 %v1226
    %v1242 = vunpack.c.l.b16 %v1227
    %v1243 = vunpack.c.h.b16 %v1227
    %v1244 = vpack.c.b16 %v1238, %v1236
    %v1245 = vpack.c.b16 %v1239, %v1237
    %v1246 = vpack.c.b16 %v1242, %v1240
    %v1247 = vpack.c.b16 %v1243, %v1241
    %v1251 = vsel %vm189, %v1231, 0
    %v1254 = vand.u32 %v1246, %v433
    %v1257 = vand.u32 %v1247, %v433
    %1259 = vmatpush.bf16.msra.mxu0 0
    %1260 = vmatpush.bf16.msra.mxu0 0
    %1261 = vmatpush.bf16.msra.mxu0 0
    %1262 = vmatpush.bf16.msra.mxu0 0
    %1263 = vmatpush.bf16.msra.mxu0 0
    %1264 = vmatpush.bf16.msra.mxu0 0
    %1265 = vmatpush.bf16.msra.mxu0 %v1254
    %1266 = vmatpush.bf16.msra.mxu0 %v1244
    %1267 = vmatmul.bf16.gmra.mxu0 %v1251
    %v1268 = vpop.f32.mrf.mxu0
    %v1269 = vadd.f32 0.0, %v1268
    %v1270 = vpop.f32.mrf.mxu0
    %1271 = vdwg.mxu0
    %1272 = vmatpush.bf16.msra.mxu0 0
    %1273 = vmatpush.bf16.msra.mxu0 0
    %1274 = vmatpush.bf16.msra.mxu0 0
    %1275 = vmatpush.bf16.msra.mxu0 0
    %1276 = vmatpush.bf16.msra.mxu0 0
    %1277 = vmatpush.bf16.msra.mxu0 0
    %1278 = vmatpush.bf16.msra.mxu0 %v1257
    %1279 = vmatpush.bf16.msra.mxu0 %v1245
    %1280 = vmatmul.bf16.gmra.mxu0 %v1251
    %v1281 = vpop.f32.mrf.mxu0
    %v1282 = vadd.f32 0.0, %v1281
    %v1283 = vpop.f32.mrf.mxu0
    %1284 = vdwg.mxu0
    %v1285 = vadd.f32 %v1220, %v1269
    %v1286 = vadd.f32 %v1221, %v1282
    %v1287 = vld [vmem:[#allocation2 + $0xc] sm:$0x4]
    %s1288 = scalar_lea.vmem %s4, 448
    %v1289 = vld [vmem:[%s1288] sm:$0xff]
    %v1290 = vld [vmem:[%s1288 + $0x8] sm:$0xff]
    %v1291 = vld [vmem:[%s1288 + $0x10] sm:$0xff]
    %v1292 = vld [vmem:[%s1288 + $0x18] sm:$0x11]
    %v1294 = vunpack.c.l.b16 %v1287
    %v1295 = vpack.c.b16 %v1294, %v1294
    %v1296 = vrot.slane %v1295, 2
    %v1301 = vunpack.c.l.b16 %v1289
    %v1302 = vunpack.c.h.b16 %v1289
    %v1303 = vunpack.c.l.b16 %v1290
    %v1304 = vunpack.c.h.b16 %v1290
    %v1305 = vunpack.c.l.b16 %v1291
    %v1306 = vunpack.c.h.b16 %v1291
    %v1307 = vunpack.c.l.b16 %v1292
    %v1308 = vunpack.c.h.b16 %v1292
    %v1309 = vpack.c.b16 %v1303, %v1301
    %v1310 = vpack.c.b16 %v1304, %v1302
    %v1311 = vpack.c.b16 %v1307, %v1305
    %v1312 = vpack.c.b16 %v1308, %v1306
    %v1316 = vsel %vm189, %v1296, 0
    %v1319 = vand.u32 %v1311, %v433
    %v1322 = vand.u32 %v1312, %v433
    %1324 = vmatpush.bf16.msra.mxu0 0
    %1325 = vmatpush.bf16.msra.mxu0 0
    %1326 = vmatpush.bf16.msra.mxu0 0
    %1327 = vmatpush.bf16.msra.mxu0 0
    %1328 = vmatpush.bf16.msra.mxu0 0
    %1329 = vmatpush.bf16.msra.mxu0 0
    %1330 = vmatpush.bf16.msra.mxu0 %v1319
    %1331 = vmatpush.bf16.msra.mxu0 %v1309
    %1332 = vmatmul.bf16.gmra.mxu0 %v1316
    %v1333 = vpop.f32.mrf.mxu0
    %v1334 = vadd.f32 0.0, %v1333
    %v1335 = vpop.f32.mrf.mxu0
    %1336 = vdwg.mxu0
    %1337 = vmatpush.bf16.msra.mxu0 0
    %1338 = vmatpush.bf16.msra.mxu0 0
    %1339 = vmatpush.bf16.msra.mxu0 0
    %1340 = vmatpush.bf16.msra.mxu0 0
    %1341 = vmatpush.bf16.msra.mxu0 0
    %1342 = vmatpush.bf16.msra.mxu0 0
    %1343 = vmatpush.bf16.msra.mxu0 %v1322
    %1344 = vmatpush.bf16.msra.mxu0 %v1310
    %1345 = vmatmul.bf16.gmra.mxu0 %v1316
    %v1346 = vpop.f32.mrf.mxu0
    %v1347 = vadd.f32 0.0, %v1346
    %v1348 = vpop.f32.mrf.mxu0
    %1349 = vdwg.mxu0
    %v1350 = vadd.f32 %v1285, %v1334
    %v1351 = vadd.f32 %v1286, %v1347
    %v1352 = vld [vmem:[#allocation2 + $0xc] sm:$0x8]
    %s1353 = scalar_lea.vmem %s4, 480
    %v1354 = vld [vmem:[%s1353] sm:$0xff]
    %v1355 = vld [vmem:[%s1353 + $0x8] sm:$0xff]
    %v1356 = vld [vmem:[%s1353 + $0x10] sm:$0xff]
    %v1357 = vld [vmem:[%s1353 + $0x18] sm:$0x11]
    %v1359 = vunpack.c.l.b16 %v1352
    %v1360 = vpack.c.b16 %v1359, %v1359
    %v1361 = vrot.slane %v1360, 3
    %v1366 = vunpack.c.l.b16 %v1354
    %v1367 = vunpack.c.h.b16 %v1354
    %v1368 = vunpack.c.l.b16 %v1355
    %v1369 = vunpack.c.h.b16 %v1355
    %v1370 = vunpack.c.l.b16 %v1356
    %v1371 = vunpack.c.h.b16 %v1356
    %v1372 = vunpack.c.l.b16 %v1357
    %v1373 = vunpack.c.h.b16 %v1357
    %v1374 = vpack.c.b16 %v1368, %v1366
    %v1375 = vpack.c.b16 %v1369, %v1367
    %v1376 = vpack.c.b16 %v1372, %v1370
    %v1377 = vpack.c.b16 %v1373, %v1371
    %v1381 = vsel %vm189, %v1361, 0
    %v1384 = vand.u32 %v1376, %v433
    %v1387 = vand.u32 %v1377, %v433
    %1389 = vmatpush.bf16.msra.mxu0 0
    %1390 = vmatpush.bf16.msra.mxu0 0
    %1391 = vmatpush.bf16.msra.mxu0 0
    %1392 = vmatpush.bf16.msra.mxu0 0
    %1393 = vmatpush.bf16.msra.mxu0 0
    %1394 = vmatpush.bf16.msra.mxu0 0
    %1395 = vmatpush.bf16.msra.mxu0 %v1384
    %1396 = vmatpush.bf16.msra.mxu0 %v1374
    %1397 = vmatmul.bf16.gmra.mxu0 %v1381
    %v1398 = vpop.f32.mrf.mxu0
    %v1399 = vadd.f32 0.0, %v1398
    %v1400 = vpop.f32.mrf.mxu0
    %1401 = vdwg.mxu0
    %1402 = vmatpush.bf16.msra.mxu0 0
    %1403 = vmatpush.bf16.msra.mxu0 0
    %1404 = vmatpush.bf16.msra.mxu0 0
    %1405 = vmatpush.bf16.msra.mxu0 0
    %1406 = vmatpush.bf16.msra.mxu0 0
    %1407 = vmatpush.bf16.msra.mxu0 0
    %1408 = vmatpush.bf16.msra.mxu0 %v1387
    %1409 = vmatpush.bf16.msra.mxu0 %v1375
    %1410 = vmatmul.bf16.gmra.mxu0 %v1381
    %v1411 = vpop.f32.mrf.mxu0
    %v1412 = vadd.f32 0.0, %v1411
    %v1413 = vpop.f32.mrf.mxu0
    %1414 = vdwg.mxu0
    %v1415 = vadd.f32 %v1350, %v1399
    %v1416 = vadd.f32 %v1351, %v1412
    %vm1417 = vcmask 1041408
    %v1418 = vsel %vm1417, %v1415, 0.0
    %v1419 = vrot.slane %v1418, 4
    %v1420 = vadd.f32 %v1418, %v1419
    %v1421 = vrot.slane %v1420, 2
    %v1422 = vadd.f32 %v1420, %v1421
    %v1423 = vrot.slane %v1422, 1
    %v1424 = vadd.f32 %v1422, %v1423
    %vm1425 = vcmask 173056
    %v1426 = vsel %vm1425, %v1416, 0.0
    %v1427 = vrot.slane %v1426, 4
    %v1428 = vadd.f32 %v1426, %v1427
    %v1429 = vrot.slane %v1428, 2
    %v1430 = vadd.f32 %v1428, %v1429
    %v1431 = vrot.slane %v1430, 1
    %v1432 = vadd.f32 %v1430, %v1431
    %v1433 = vrcp.pop 2.0
    %v1434 = vmul.f32 2.0, %v1433
    %v1435 = vsub.f32 1.0, %v1434
    %v1436 = vmul.f32 %v1433, %v1435
    %v1437 = vadd.f32 %v1433, %v1436
    %vm1438 = vweird.f32 %v1433
    %v1439 = vsel %vm1438, %v1433, %v1437
    %v1440 = vmul.f32 %v1424, %v1439
    %v1441 = vmul.f32 %v1432, %v1439
    %v1442 = vmul.f32 %v1415, %v1415
    %v1443 = vmul.f32 %v1416, %v1416
    %v1444 = vsel %vm1417, %v1442, 0.0
    %v1445 = vrot.slane %v1444, 4
    %v1446 = vadd.f32 %v1444, %v1445
    %v1447 = vrot.slane %v1446, 2
    %v1448 = vadd.f32 %v1446, %v1447
    %v1449 = vrot.slane %v1448, 1
    %v1450 = vadd.f32 %v1448, %v1449
    %v1451 = vsel %vm1425, %v1443, 0.0
    %v1452 = vrot.slane %v1451, 4
    %v1453 = vadd.f32 %v1451, %v1452
    %v1454 = vrot.slane %v1453, 2
    %v1455 = vadd.f32 %v1453, %v1454
    %v1456 = vrot.slane %v1455, 1
    %v1457 = vadd.f32 %v1455, %v1456
    %v1458 = vmul.f32 %v1450, %v1439
    %v1459 = vmul.f32 %v1457, %v1439
    %v1460 = vmul.f32 %v1440, %v1440
    %v1461 = vmul.f32 %v1441, %v1441
    %v1462 = vsub.f32 %v1458, %v1460
    %v1463 = vsub.f32 %v1459, %v1461
    %v1464 = vld [vmem:[%s5] sm:$0x3]
    %v1465 = vadd.f32 %v1462, 1e-05
    %v1466 = vadd.f32 %v1463, 1e-05
    %v1467 = vrsqrt.pop %v1465
    %v1468 = vmul.f32 %v1467, %v1465
    %v1469 = vmul.f32 %v1468, %v1467
    %v1470 = vmul.f32 0.5, %v1469
    %v1471 = vsub.f32 1.5, %v1470
    %v1472 = vmul.f32 %v1467, %v1471
    %vm1473 = vweird.f32 %v1465
    %vm1474 = vweird.f32 %v1467
    %vm1475 = vmor %vm1473, %vm1474
    %v1476 = vsel %vm1475, %v1467, %v1472
    %v1477 = vrsqrt.pop %v1466
    %v1478 = vmul.f32 %v1477, %v1466
    %v1479 = vmul.f32 %v1478, %v1477
    %v1480 = vmul.f32 0.5, %v1479
    %v1481 = vsub.f32 1.5, %v1480
    %v1482 = vmul.f32 %v1477, %v1481
    %vm1483 = vweird.f32 %v1466
    %vm1484 = vweird.f32 %v1477
    %vm1485 = vmor %vm1483, %vm1484
    %v1486 = vsel %vm1485, %v1477, %v1482
    %v1489 = vrot.slane %v1486, 7
    %vm1490 = vcmask 1040384
    %v1491 = vsel %vm1490, %v1476, %v1489
    %v1493 = vmul.f32 %v1464, %v1491
    %v1495 = vperm.slane %v1493, 0
    %v1496 = vperm.slane %v1493, 1
    %v1499 = vmul.f32 %v1415, %v1495
    %v1500 = vmul.f32 %v1416, %v1496
    %v1501 = vld [vmem:[%s6] sm:$0x3]
    %v1502 = vmul.f32 %v1440, %v1495
    %v1503 = vmul.f32 %v1441, %v1496
    %v1506 = vrot.slane %v1503, 7
    %v1507 = vsel %vm1490, %v1502, %v1506
    %v1509 = vsub.f32 %v1501, %v1507
    %v1511 = vperm.slane %v1509, 0
    %v1512 = vperm.slane %v1509, 1
    %v1515 = vadd.f32 %v1499, %v1511
    %v1516 = vadd.f32 %v1500, %v1512
    %v1517 = vmax.f32 %v1515, -1.0
    %v1518 = vmax.f32 %v1516, -1.0
    %v1519 = vmin.f32 %v1517, 1.0
    %v1520 = vmin.f32 %v1518, 1.0
    %v1521 = vpack.c.bf16 %v1519, %v1519
    %v1522 = vpack.c.bf16 %v1520, %v1520
    %v1523 = vld [vmem:[%s7] sm:$0xf]
    %v1524 = vld [vmem:[%s7 + $0x4] sm:$0xf]
    %v1525 = vld [vmem:[%s7 + $0x8] sm:$0xf]
    %v1526 = vld [vmem:[%s7 + $0xc] sm:$0xf]
    %v1527 = vld [vmem:[%s7 + $0x10] sm:$0xf]
    %v1528 = vld [vmem:[%s7 + $0x14] sm:$0xf]
    %v1529 = vld [vmem:[%s7 + $0x18] sm:$0xf]
    %v1530 = vld [vmem:[%s7 + $0x1c] sm:$0xf]
    %v1531 = vld [vmem:[%s7 + $0x20] sm:$0xf]
    %v1532 = vld [vmem:[%s7 + $0x24] sm:$0xf]
    %v1533 = vld [vmem:[%s7 + $0x28] sm:$0xf]
    %v1534 = vld [vmem:[%s7 + $0x2c] sm:$0xf]
    %v1535 = vld [vmem:[%s7 + $0x30] sm:$0xf]
    %v1536 = vld [vmem:[%s7 + $0x34] sm:$0xf]
    %v1537 = vld [vmem:[%s7 + $0x38] sm:$0xf]
    %v1538 = vld [vmem:[%s7 + $0x3c] sm:$0xf]
    %v1539 = vld [vmem:[%s7 + $0x40] sm:$0xf]
    %v1540 = vld [vmem:[%s7 + $0x44] sm:$0xf]
    %v1541 = vld [vmem:[%s7 + $0x48] sm:$0x7]
    %v1561 = vunpack.c.l.b16 %v1523
    %v1562 = vunpack.c.l.b16 %v1524
    %v1563 = vunpack.c.l.b16 %v1525
    %v1564 = vunpack.c.l.b16 %v1526
    %v1565 = vunpack.c.l.b16 %v1527
    %v1566 = vunpack.c.l.b16 %v1528
    %v1567 = vunpack.c.l.b16 %v1529
    %v1568 = vunpack.c.l.b16 %v1530
    %v1569 = vunpack.c.l.b16 %v1531
    %v1570 = vunpack.c.l.b16 %v1532
    %v1571 = vunpack.c.l.b16 %v1533
    %v1572 = vunpack.c.l.b16 %v1534
    %v1573 = vunpack.c.l.b16 %v1535
    %v1574 = vunpack.c.l.b16 %v1536
    %v1575 = vunpack.c.l.b16 %v1537
    %v1576 = vunpack.c.l.b16 %v1538
    %v1577 = vunpack.c.l.b16 %v1539
    %v1578 = vunpack.c.l.b16 %v1540
    %v1579 = vunpack.c.l.b16 %v1541
    %v1580 = vpack.c.b16 %v1562, %v1561
    %v1581 = vpack.c.b16 %v1564, %v1563
    %v1582 = vpack.c.b16 %v1566, %v1565
    %v1583 = vpack.c.b16 %v1568, %v1567
    %v1584 = vpack.c.b16 %v1570, %v1569
    %v1585 = vpack.c.b16 %v1572, %v1571
    %v1586 = vpack.c.b16 %v1574, %v1573
    %v1587 = vpack.c.b16 %v1576, %v1575
    %v1588 = vpack.c.b16 %v1578, %v1577
    %v1589 = vpack.c.b16 %v1579, %v1579
    %vm1599 = vcmask 179200
    %v1601 = vsel %vm1599, %v1522, 0
    %vm1603 = vcmask 1042432
    %v1605 = vsel %vm1603, %v1589, 0
    %1607 = vmatpush.bf16.msra.mxu0 %v1587
    %1608 = vmatpush.bf16.msra.mxu0 %v1586
    %1609 = vmatpush.bf16.msra.mxu0 %v1585
    %1610 = vmatpush.bf16.msra.mxu0 %v1584
    %1611 = vmatpush.bf16.msra.mxu0 %v1583
    %1612 = vmatpush.bf16.msra.mxu0 %v1582
    %1613 = vmatpush.bf16.msra.mxu0 %v1581
    %1614 = vmatpush.bf16.msra.mxu0 %v1580
    %1615 = vmatmul.bf16.gmra.mxu0 %v1521
    %v1616 = vpop.f32.mrf.mxu0
    %v1617 = vadd.f32 0.0, %v1616
    %v1618 = vpop.f32.mrf.mxu0
    %1619 = vdwg.mxu0
    %1620 = vmatpush.bf16.msra.mxu0 0
    %1621 = vmatpush.bf16.msra.mxu0 0
    %1622 = vmatpush.bf16.msra.mxu0 0
    %1623 = vmatpush.bf16.msra.mxu0 0
    %1624 = vmatpush.bf16.msra.mxu0 0
    %1625 = vmatpush.bf16.msra.mxu0 0
    %1626 = vmatpush.bf16.msra.mxu0 %v1605
    %1627 = vmatpush.bf16.msra.mxu0 %v1588
    %1628 = vmatmul.bf16.gmra.mxu0 %v1601
    %v1629 = vpop.f32.mrf.mxu0
    %v1630 = vadd.f32 %v1617, %v1629
    %v1631 = vpop.f32.mrf.mxu0
    %1632 = vdwg.mxu0
    %vm1633 = vcmask 74752
    %v1634 = vsel %vm1633, %v1630, 0.0
    %v1635 = vrot.slane %v1634, 4
    %v1636 = vadd.f32 %v1634, %v1635
    %v1637 = vrot.slane %v1636, 2
    %v1638 = vadd.f32 %v1636, %v1637
    %v1639 = vrot.slane %v1638, 1
    %v1640 = vadd.f32 %v1638, %v1639
    %v1641 = vmul.f32 %v1640, %v1439
    %v1642 = vmul.f32 %v1630, %v1630
    %v1643 = vsel %vm1633, %v1642, 0.0
    %v1644 = vrot.slane %v1643, 4
    %v1645 = vadd.f32 %v1643, %v1644
    %v1646 = vrot.slane %v1645, 2
    %v1647 = vadd.f32 %v1645, %v1646
    %v1648 = vrot.slane %v1647, 1
    %v1649 = vadd.f32 %v1647, %v1648
    %v1650 = vmul.f32 %v1649, %v1439
    %v1651 = vmul.f32 %v1641, %v1641
    %v1652 = vsub.f32 %v1650, %v1651
    %v1653 = vld [vmem:[%s8] sm:$0x1]
    %v1654 = vadd.f32 %v1652, 1e-05
    %v1655 = vrsqrt.pop %v1654
    %v1656 = vmul.f32 %v1655, %v1654
    %v1657 = vmul.f32 %v1656, %v1655
    %v1658 = vmul.f32 0.5, %v1657
    %v1659 = vsub.f32 1.5, %v1658
    %v1660 = vmul.f32 %v1655, %v1659
    %vm1661 = vweird.f32 %v1654
    %vm1662 = vweird.f32 %v1655
    %vm1663 = vmor %vm1661, %vm1662
    %v1664 = vsel %vm1663, %v1655, %v1660
    %v1665 = vmul.f32 %v1653, %v1664
    %v1667 = vperm.slane %v1665, 0
    %v1669 = vmul.f32 %v1630, %v1667
    %v1670 = vld [vmem:[%s9] sm:$0x1]
    %v1671 = vmul.f32 %v1641, %v1665
    %v1672 = vsub.f32 %v1670, %v1671
    %v1674 = vperm.slane %v1672, 0
    %v1676 = vadd.f32 %v1669, %v1674
    %v1677 = vsel %vm1633, %v1676, -inf
    %1678 = vmax.xlane.f32.xlu0 %v1677
    %v1679 = vpop.xlane.xlu0 %1678
    %v1680 = vsub.f32 %v1676, %v1679
    %v1681 = vmul.f32 %v1680, 1.442695
    %v1682 = vpow.pop %v1681
    %v1683 = vsel %vm1633, %v1682, 0.0
    %1684 = vadd.xlane.f32.xlu0 %v1683
    %v1685 = vpop.xlane.xlu0 %1684
    %v1686 = vlog2.pop %v1685
    %v1687 = vmul.f32 %v1686, 0.6931472
    %v1688 = vadd.f32 %v1687, %v1679
    %v1689 = vsub.f32 %v1676, %v1688
    %1690 = vst.msk [vmem:[#allocation3] sm:$0x3] %vm1633, %v1689
    // Predicated region
    $region42: #{net_forward.3} parent=1 // pred_check
      _
    $region43: #{net_forward.3} parent=1 // pred_check_branch
      %1692 = sbr.rel (0) target = $region45
    $region44: #{net_forward.3} parent=1 // pred_region
      %1694 = vsyncadd [#allocation4], 0
      %s1696 = sshll.u32 [#allocation3], 4
      %s1697 = int_to_ptr.vmem [resolvable:$true] %s1696
      %s1698 = sshll.u32 %s10, 4
      %s1699 = int_to_ptr.hbm [resolvable:$true] %s1698
      %1701 = dma.vmem_to_hbm [thread:$0]  %s1697, 32, %s1699, [#allocation4]
    $region45: #{net_forward.3} parent=1 // pred_fallthru
      _
    // Predicated region
    $region46: #{net_forward.3} parent=1 // pred_check
      _
    $region47: #{net_forward.3} parent=1 // pred_check_branch
      %1703 = sbr.rel (0) target = $region49
    $region48: #{net_forward.3} parent=1 // pred_region
      %1705 = dma.done [#allocation4], 32
    $region49: #{net_forward.3} parent=1 // pred_fallthru
      _
    %1706 = vsyncpa [#allocation4], 1

</llo_original>
